<compile_context>
chip_gen: v5e
topology: v5e:2x2
jax: 0.10.0
libtpu: 0.0.40
codegen_flags: <defaults>
</compile_context>

<pallas_src>
import functools

import jax
import jax.numpy as jnp
from jax.experimental import pallas as pl
from jax.experimental.pallas import tpu as pltpu


def attention_kernel(dec_ref, lis_ref, w1_ref, b1_ref, w2_ref, b2_ref,
                     score_ref, ctx_ref, *, t_valid):
    BB, T, D_in = lis_ref.shape
    D_out = w1_ref.shape[1]

    # --- decoder projection on the MXU: bf16 inputs, f32 accumulation ---
    dec = dec_ref[...]                                       # (BB, D_in)
    d = jnp.dot(dec.astype(jnp.bfloat16), w1_ref[...],
                preferred_element_type=jnp.float32) + b1_ref[...]
    d = jnp.maximum(d, 0.0)                                  # (BB, D_out) f32

    # --- listener projection: one (BB*T, D_in) @ (D_in, D_out) matmul ---
    lis = lis_ref[...]                                       # (BB, T, D_in)
    l = jnp.dot(lis.reshape(BB * T, D_in).astype(jnp.bfloat16), w2_ref[...],
                preferred_element_type=jnp.float32) + b2_ref[...]
    l = jnp.maximum(l, 0.0)
    l3 = l.reshape(BB, T, D_out)                             # (BB, T, D_out) f32

    # Chunk the T axis so the (BB, tc, D_out) f32 broadcast temporaries stay
    # within ~128 KiB (bounds vreg pressure at large bb*T*D_out).  Static.
    row_bytes = BB * D_out * 4
    t_chunk = min(T, max(8, (128 * 1024 // row_bytes) // 8 * 8))

    # --- energy[b, t] = <d[b], l3[b, t]> : VPU multiply + lane (XLU) reduce ---
    e_chunks = []
    for t0 in range(0, T, t_chunk):
        tc = min(t_chunk, T - t0)
        e_chunks.append(jnp.sum(d[:, None, :] * l3[:, t0:t0 + tc, :], axis=-1))
    energy = e_chunks[0] if len(e_chunks) == 1 else jnp.concatenate(e_chunks, axis=-1)

    # Mask key positions introduced by T padding (statically skipped when no pad).
    if t_valid < T:
        col = jax.lax.broadcasted_iota(jnp.int32, (BB, T), 1)
        energy = jnp.where(col < t_valid, energy, -jnp.inf)

    # --- softmax over T in f32, exact normalization (rows sum to 1) ---
    m = jnp.max(energy, axis=-1, keepdims=True)
    e = jnp.exp(energy - m)
    s = e / jnp.sum(e, axis=-1, keepdims=True)               # (BB, T) f32
    score_ref[...] = s.astype(score_ref.dtype)

    # --- context[b, :] = sum_t s[b, t] * l3[b, t, :] : VPU + sublane reduce ---
    ctx = jnp.zeros((BB, D_out), jnp.float32)
    for t0 in range(0, T, t_chunk):
        tc = min(t_chunk, T - t0)
        ctx = ctx + jnp.sum(l3[:, t0:t0 + tc, :] * s[:, t0:t0 + tc, None], axis=1)
    ctx_ref[...] = ctx.astype(ctx_ref.dtype)


def _round_up(x, m):
    return ((x + m - 1) // m) * m


def _choose_bb(B, T_pad, D_in, D_out, itemsize):
    """Batch block: multiple of 16, listener block >= ~512 KiB per grid step,
    in-kernel working set <= ~20 MiB, and >= 2 grid steps when the batch is
    large enough (v7x 2-TC / megacore sharding)."""
    row_bytes = T_pad * D_in * itemsize
    bb = _round_up(max(16, -(-512 * 1024 // row_bytes)), 16)

    def footprint(b):
        lis = 2 * b * row_bytes                       # double-buffered input block
        proj = b * T_pad * D_out * 4                  # f32 listener projection
        outs = 2 * b * (T_pad + D_out) * itemsize     # double-buffered outputs
        return lis + proj + outs

    while bb > 16 and footprint(bb) > 20 * 1024 * 1024:
        bb -= 16
    b_cap = _round_up(B, 16)
    bb = min(bb, b_cap)
    if bb == b_cap and b_cap >= 32:
        half = _round_up(b_cap // 2, 16)
        if half * row_bytes >= 512 * 1024:            # keep per-step block large
            bb = half                                 # and >= 2 grid steps
    return bb


def attention(decoder_output, listener_output, w1, b1, w2, b2, *, bb=None):
    """decoder_output: (B, 1, D_in); listener_output: (B, T, D_in).
    w1, w2: (D_in, D_out) (PyTorch weight transposed); b1, b2: (1, D_out).
    Returns (attention_score (B, T), context (B, D_out))."""
    B, one, D_in = decoder_output.shape
    assert one == 1
    _, T, _ = listener_output.shape
    D_out = w1.shape[1]
    dtype = decoder_output.dtype
    itemsize = jnp.dtype(dtype).itemsize

    # Pad T to a multiple of 8 so the in-kernel reshapes are layout-preserving;
    # the padded key positions are masked inside the kernel.
    T_pad = _round_up(T, 8)

    if bb is None:
        bb = _choose_bb(B, T_pad, D_in, D_out, itemsize)
    assert bb % 16 == 0, "batch block must be a multiple of 16 (bf16 sublane packing)"

    # Drop the size-1 query dim on the wrapper side -> lane-dense 2-D layout.
    dec2d = decoder_output.reshape(B, D_in)
    lis = listener_output

    # Pad batch to a multiple of bb.  Padded rows produce a valid (uniform-ish)
    # softmax over the bias-only projections; they are sliced off below.
    B_pad = _round_up(B, bb)
    if B_pad != B or T_pad != T:
        dec2d = jnp.pad(dec2d, ((0, B_pad - B), (0, 0)))
        lis = jnp.pad(lis, ((0, B_pad - B), (0, T_pad - T), (0, 0)))

    # Grid-invariant weights: pre-cast to bf16 once outside the kernel (halves
    # their DMA/VMEM, removes per-step VPU casts).  Biases stay f32.
    w1_bf = w1.astype(jnp.bfloat16)
    w2_bf = w2.astype(jnp.bfloat16)
    b1_f = b1.astype(jnp.float32)
    b2_f = b2.astype(jnp.float32)

    grid = (B_pad // bb,)
    kernel = functools.partial(attention_kernel, t_valid=T)

    score, ctx = pl.pallas_call(
        kernel,
        out_shape=(
            jax.ShapeDtypeStruct((B_pad, T_pad), dtype),
            jax.ShapeDtypeStruct((B_pad, D_out), dtype),
        ),
        grid_spec=pltpu.PrefetchScalarGridSpec(
            num_scalar_prefetch=0,
            grid=grid,
            in_specs=[
                pl.BlockSpec((bb, D_in), lambda i: (i, 0)),
                pl.BlockSpec((bb, T_pad, D_in), lambda i: (i, 0, 0)),
                pl.BlockSpec((D_in, D_out), lambda i: (0, 0)),
                pl.BlockSpec((1, D_out), lambda i: (0, 0)),
                pl.BlockSpec((D_in, D_out), lambda i: (0, 0)),
                pl.BlockSpec((1, D_out), lambda i: (0, 0)),
            ],
            out_specs=[
                pl.BlockSpec((bb, T_pad), lambda i: (i, 0)),
                pl.BlockSpec((bb, D_out), lambda i: (i, 0)),
            ],
        ),
        compiler_params=pltpu.CompilerParams(
            dimension_semantics=("parallel",),
            # v5e's scoped-VMEM default is only 16 MiB; be explicit (also fits
            # comfortably under v7x's 64 MiB physical VMEM).
            vmem_limit_bytes=32 * 1024 * 1024,
        ),
    )(dec2d, lis, w1_bf, b1_f, w2_bf, b2_f)

    return score[:B, :T], ctx[:B]


def attention_ref(decoder_output, listener_output, w1, b1, w2, b2):
    d = jnp.maximum(jnp.einsum("bqi,io->bqo", decoder_output, w1) + b1, 0.0)
    l = jnp.maximum(jnp.einsum("bti,io->bto", listener_output, w2) + b2, 0.0)
    energy = jnp.einsum("bqo,bto->bqt", d, l)[:, 0, :]
    s = jax.nn.softmax(energy, axis=-1)
    ctx = jnp.sum(l * s[:, :, None], axis=1)
    return s, ctx


if __name__ == "__main__":
    B, T = 16, 16
    input_size, output_size = 32, 32

    key = jax.random.PRNGKey(0)
    k1, k2, k3, k4, k5, k6 = jax.random.split(key, 6)

    # Deterministic parameter init (PyTorch Linear: weight (out,in), bias (out,))
    bound = 1.0 / jnp.sqrt(input_size)
    W1_pt = jax.random.uniform(k1, (output_size, input_size), jnp.float32, -bound, bound)
    b1_pt = jax.random.uniform(k2, (output_size,), jnp.float32, -bound, bound)
    W2_pt = jax.random.uniform(k3, (output_size, input_size), jnp.float32, -bound, bound)
    b2_pt = jax.random.uniform(k4, (output_size,), jnp.float32, -bound, bound)

    # Pre-transpose to (D_in, D_out) for the kernel's row-major matmul.
    w1 = W1_pt.T
    b1 = b1_pt.reshape(1, output_size)
    w2 = W2_pt.T
    b2 = b2_pt.reshape(1, output_size)

    decoder_output = jax.random.normal(k5, (B, 1, input_size), jnp.float32)
    listener_output = jax.random.normal(k6, (B, T, input_size), jnp.float32)

    score, context = attention(decoder_output, listener_output, w1, b1, w2, b2)
    jax.block_until_ready((score, context))

    score_ref, context_ref = attention_ref(decoder_output, listener_output, w1, b1, w2, b2)
    # bf16 MXU inputs vs. an all-f32 reference -> loosened tolerance.
    assert jnp.allclose(score, score_ref, atol=2e-2, rtol=2e-2)
    assert jnp.allclose(context, context_ref, atol=2e-2, rtol=2e-2)

    print("KERNEL_OK")
</pallas_src>

<mosaic_0001>
module attributes {stable_mosaic.version = 11 : i64} {
  func.func @attention_kernel(%arg0: i32, %arg1: memref<16x32xf32, #tpu.memory_space<vmem>>, %arg2: memref<16x16x32xf32, #tpu.memory_space<vmem>>, %arg3: memref<32x32xbf16, #tpu.memory_space<vmem>>, %arg4: memref<1x32xf32, #tpu.memory_space<vmem>>, %arg5: memref<32x32xbf16, #tpu.memory_space<vmem>>, %arg6: memref<1x32xf32, #tpu.memory_space<vmem>>, %arg7: memref<16x16xf32, #tpu.memory_space<vmem>>, %arg8: memref<16x32xf32, #tpu.memory_space<vmem>>) attributes {dimension_semantics = [#tpu.dimension_semantics<parallel>], iteration_bounds = array<i64: 1>, scalar_prefetch = 0 : i64, scratch_operands = 0 : i64, tpu.core_type = #tpu.core_type<tc>, window_params = [{transform_indices = @transform_0, window_bounds = array<i64: 16, 32>}, {transform_indices = @transform_1, window_bounds = array<i64: 16, 16, 32>}, {pipeline_mode = #tpu.pipeline_mode<synchronous>, transform_indices = @transform_2, window_bounds = array<i64: 32, 32>}, {pipeline_mode = #tpu.pipeline_mode<synchronous>, transform_indices = @transform_3, window_bounds = array<i64: 1, 32>}, {pipeline_mode = #tpu.pipeline_mode<synchronous>, transform_indices = @transform_4, window_bounds = array<i64: 32, 32>}, {pipeline_mode = #tpu.pipeline_mode<synchronous>, transform_indices = @transform_5, window_bounds = array<i64: 1, 32>}, {transform_indices = @transform_6, window_bounds = array<i64: 16, 16>}, {transform_indices = @transform_7, window_bounds = array<i64: 16, 32>}]} {
    %c0 = arith.constant 0 : index
    %c0_0 = arith.constant 0 : index
    %0 = vector.load %arg1[%c0, %c0_0] : memref<16x32xf32, #tpu.memory_space<vmem>>, vector<16x32xf32>
    %1 = arith.truncf %0 : vector<16x32xf32> to vector<16x32xbf16>
    %c0_1 = arith.constant 0 : index
    %c0_2 = arith.constant 0 : index
    %2 = vector.load %arg3[%c0_1, %c0_2] : memref<32x32xbf16, #tpu.memory_space<vmem>>, vector<32x32xbf16>
    %cst = arith.constant dense<0.000000e+00> : vector<16x32xf32>
    %3 = tpu.matmul %1, %2, %cst {dimension_numbers = #tpu.dot_dimension_numbers<[1], [0], [0], [1], [0, 0, 1, 1], [], []>} : vector<16x32xbf16>, vector<32x32xbf16>, vector<16x32xf32> -> vector<16x32xf32>
    %c0_3 = arith.constant 0 : index
    %c0_4 = arith.constant 0 : index
    %4 = vector.load %arg4[%c0_3, %c0_4] : memref<1x32xf32, #tpu.memory_space<vmem>>, vector<1x32xf32>
    %5 = vector.broadcast %4 : vector<1x32xf32> to vector<16x32xf32>
    %6 = arith.addf %3, %5 : vector<16x32xf32>
    %cst_5 = arith.constant 0.000000e+00 : f32
    %7 = vector.broadcast %cst_5 : f32 to vector<16x32xf32>
    %8 = arith.maximumf %6, %7 : vector<16x32xf32>
    %c0_6 = arith.constant 0 : index
    %c0_7 = arith.constant 0 : index
    %c0_8 = arith.constant 0 : index
    %9 = vector.load %arg2[%c0_6, %c0_7, %c0_8] : memref<16x16x32xf32, #tpu.memory_space<vmem>>, vector<16x16x32xf32>
    %10 = vector.shape_cast %9 : vector<16x16x32xf32> to vector<256x32xf32>
    %11 = arith.truncf %10 : vector<256x32xf32> to vector<256x32xbf16>
    %c0_9 = arith.constant 0 : index
    %c0_10 = arith.constant 0 : index
    %12 = vector.load %arg5[%c0_9, %c0_10] : memref<32x32xbf16, #tpu.memory_space<vmem>>, vector<32x32xbf16>
    %cst_11 = arith.constant dense<0.000000e+00> : vector<256x32xf32>
    %13 = tpu.matmul %11, %12, %cst_11 {dimension_numbers = #tpu.dot_dimension_numbers<[1], [0], [0], [1], [0, 0, 1, 1], [], []>} : vector<256x32xbf16>, vector<32x32xbf16>, vector<256x32xf32> -> vector<256x32xf32>
    %c0_12 = arith.constant 0 : index
    %c0_13 = arith.constant 0 : index
    %14 = vector.load %arg6[%c0_12, %c0_13] : memref<1x32xf32, #tpu.memory_space<vmem>>, vector<1x32xf32>
    %15 = vector.broadcast %14 : vector<1x32xf32> to vector<256x32xf32>
    %16 = arith.addf %13, %15 : vector<256x32xf32>
    %cst_14 = arith.constant 0.000000e+00 : f32
    %17 = vector.broadcast %cst_14 : f32 to vector<256x32xf32>
    %18 = arith.maximumf %16, %17 : vector<256x32xf32>
    %19 = vector.shape_cast %18 : vector<256x32xf32> to vector<16x16x32xf32>
    %20 = vector.shape_cast %8 : vector<16x32xf32> to vector<16x1x32xf32>
    %21 = vector.broadcast %20 : vector<16x1x32xf32> to vector<16x16x32xf32>
    %22 = arith.mulf %21, %19 : vector<16x16x32xf32>
    %cst_15 = arith.constant dense<0.000000e+00> : vector<16x16xf32>
    %23 = vector.multi_reduction <add>, %22, %cst_15 [2] : vector<16x16x32xf32> to vector<16x16xf32>
    %cst_16 = arith.constant dense<0xFF800000> : vector<16xf32>
    %24 = vector.multi_reduction <maximumf>, %23, %cst_16 [1] : vector<16x16xf32> to vector<16xf32>
    %25 = vector.shape_cast %24 : vector<16xf32> to vector<16x1xf32>
    %26 = vector.broadcast %25 : vector<16x1xf32> to vector<16x16xf32>
    %27 = arith.subf %23, %26 : vector<16x16xf32>
    %28 = math.exp %27 : vector<16x16xf32>
    %cst_17 = arith.constant dense<0.000000e+00> : vector<16xf32>
    %29 = vector.multi_reduction <add>, %28, %cst_17 [1] : vector<16x16xf32> to vector<16xf32>
    %30 = vector.shape_cast %29 : vector<16xf32> to vector<16x1xf32>
    %31 = vector.broadcast %30 : vector<16x1xf32> to vector<16x16xf32>
    %32 = arith.divf %28, %31 : vector<16x16xf32>
    %c0_18 = arith.constant 0 : index
    %c0_19 = arith.constant 0 : index
    %33 = vector.load %arg7[%c0_18, %c0_19] : memref<16x16xf32, #tpu.memory_space<vmem>>, vector<16x16xf32>
    tpu.vector_store %arg7[%c0_18, %c0_19], %32 {strides = array<i32>} : memref<16x16xf32, #tpu.memory_space<vmem>>, vector<16x16xf32>,
    %cst_20 = arith.constant 0.000000e+00 : f32
    %34 = vector.broadcast %cst_20 : f32 to vector<16x32xf32>
    %35 = vector.shape_cast %32 : vector<16x16xf32> to vector<16x16x1xf32>
    %36 = vector.broadcast %35 : vector<16x16x1xf32> to vector<16x16x32xf32>
    %37 = arith.mulf %19, %36 : vector<16x16x32xf32>
    %cst_21 = arith.constant dense<0.000000e+00> : vector<16x32xf32>
    %38 = vector.multi_reduction <add>, %37, %cst_21 [1] : vector<16x16x32xf32> to vector<16x32xf32>
    %39 = arith.addf %34, %38 : vector<16x32xf32>
    %c0_22 = arith.constant 0 : index
    %c0_23 = arith.constant 0 : index
    %40 = vector.load %arg8[%c0_22, %c0_23] : memref<16x32xf32, #tpu.memory_space<vmem>>, vector<16x32xf32>
    tpu.vector_store %arg8[%c0_22, %c0_23], %39 {strides = array<i32>} : memref<16x32xf32, #tpu.memory_space<vmem>>, vector<16x32xf32>,
    return
  }
  func.func @transform_0(%arg0: i32) -> (i32, i32) {
    %c0_i32 = arith.constant 0 : i32
    %c0_i32_0 = arith.constant 0 : i32
    return %arg0, %c0_i32 : i32, i32
  }
  func.func @transform_1(%arg0: i32) -> (i32, i32, i32) {
    %c0_i32 = arith.constant 0 : i32
    %c0_i32_0 = arith.constant 0 : i32
    %c0_i32_1 = arith.constant 0 : i32
    return %arg0, %c0_i32, %c0_i32_0 : i32, i32, i32
  }
  func.func @transform_2(%arg0: i32) -> (i32, i32) {
    %c0_i32 = arith.constant 0 : i32
    %c0_i32_0 = arith.constant 0 : i32
    %c0_i32_1 = arith.constant 0 : i32
    return %c0_i32, %c0_i32_0 : i32, i32
  }
  func.func @transform_3(%arg0: i32) -> (i32, i32) {
    %c0_i32 = arith.constant 0 : i32
    %c0_i32_0 = arith.constant 0 : i32
    %c0_i32_1 = arith.constant 0 : i32
    return %c0_i32, %c0_i32_0 : i32, i32
  }
  func.func @transform_4(%arg0: i32) -> (i32, i32) {
    %c0_i32 = arith.constant 0 : i32
    %c0_i32_0 = arith.constant 0 : i32
    %c0_i32_1 = arith.constant 0 : i32
    return %c0_i32, %c0_i32_0 : i32, i32
  }
  func.func @transform_5(%arg0: i32) -> (i32, i32) {
    %c0_i32 = arith.constant 0 : i32
    %c0_i32_0 = arith.constant 0 : i32
    %c0_i32_1 = arith.constant 0 : i32
    return %c0_i32, %c0_i32_0 : i32, i32
  }
  func.func @transform_6(%arg0: i32) -> (i32, i32) {
    %c0_i32 = arith.constant 0 : i32
    %c0_i32_0 = arith.constant 0 : i32
    return %arg0, %c0_i32 : i32, i32
  }
  func.func @transform_7(%arg0: i32) -> (i32, i32) {
    %c0_i32 = arith.constant 0 : i32
    %c0_i32_0 = arith.constant 0 : i32
    return %arg0, %c0_i32 : i32, i32
  }
}

</mosaic_0001>

<llo_original>
// kernel: tpu_custom_call.1
$region0: #{tpu_custom_call.1}
  #allocation0 [shape = 'u32[]', space=smem, size = 0x4, offset = 0x4, fixed_abs, tag = 'smem constant byte address 0x4 - core index']
  #allocation1 [shape = 'u32[72,128]{1,0:T(1,128)}', space=vmem, size = 0x9000, scoped, tag = 'internal scratch']
  %s0 = inlined_call_operand.hbm [shape: f32[16,32], index: 0, kind: input, shape index: {}]
  %s1 = inlined_call_operand.hbm [shape: f32[16,16,32], index: 1, kind: input, shape index: {}]
  %s2 = inlined_call_operand.hbm [shape: bf16[32,32], index: 2, kind: input, shape index: {}]
  %s3 = inlined_call_operand.vmem [shape: f32[1,32], index: 3, kind: input, shape index: {}]
  %s4 = inlined_call_operand.hbm [shape: bf16[32,32], index: 4, kind: input, shape index: {}]
  %s5 = inlined_call_operand.vmem [shape: f32[1,32], index: 5, kind: input, shape index: {}]
  %s6 = inlined_call_operand.hbm [shape: f32[16,16], index: 6, kind: output, shape index: {0}]
  %s7 = inlined_call_operand.hbm [shape: f32[16,32], index: 7, kind: output, shape index: {1}]
  %8 = xla_tuple %s6, %s7
  %s9 = sld [smem:[#allocation0]]
  $region58: #{tpu_custom_call.1} parent=0
    _
  %s11 = ssub.s32 1, %s9
  %s12 = scalar_select 0, %s11, %s9
  $region1: #{tpu_custom_call.1} parent=0
    #allocation2 [shape = 'u8[8192]{0}', space=vmem, size = 0x2000, scoped, tag = 'input window, operand 0, single buffered']
    #allocation3 [shape = 's32[1]{0}', space=sflag, size = 0x4, scoped, tag = 'scoped memory for tpu_custom_call.1']
    #allocation4 [shape = 's32[1]{0}', space=sflag, size = 0x4, scoped, tag = 'scoped memory for tpu_custom_call.1']
    #allocation5 [shape = 'u8[131072]{0}', space=vmem, size = 0x20000, scoped, tag = 'input window, operand 1, single buffered']
    #allocation6 [shape = 's32[1]{0}', space=sflag, size = 0x4, scoped, tag = 'scoped memory for tpu_custom_call.1']
    #allocation7 [shape = 'u8[8192]{0}', space=vmem, size = 0x2000, scoped, tag = 'input window, operand 2, single buffered']
    #allocation8 [shape = 'u8[8192]{0}', space=vmem, size = 0x2000, scoped, tag = 'input window, operand 4, single buffered']
    #allocation9 [shape = 's32[1]{0}', space=sflag, size = 0x4, scoped, tag = 'scoped memory for tpu_custom_call.1']
    #allocation10 [shape = 'u8[8192]{0}', space=vmem, size = 0x2000, scoped, tag = 'output window, operand 0, single buffered']
    #allocation11 [shape = 'u8[8192]{0}', space=vmem, size = 0x2000, scoped, tag = 'output window, operand 1, single buffered']
    #allocation12 [shape = 's32[1]{0}', space=sflag, size = 0x4, scoped, tag = 'scoped memory for tpu_custom_call.1']
    %13 = vsyncpa [#allocation3], 0
    %14 = vsyncpa [#allocation6], 0
    %15 = vsyncpa [#allocation9], 0
    %16 = vsyncpa [#allocation4], 0
    %17 = vsyncpa [#allocation12], 0
    // Predicated region
    $region2: #{tpu_custom_call.1} parent=1 // pred_check
      _
    $region3: #{tpu_custom_call.1} parent=1 // pred_check_branch
      %19 = sbr.rel (0) target = $region5
    $region4: #{tpu_custom_call.1} parent=1 // pred_region
      %21 = vsyncadd [#allocation3], 0
      %s22 = sshll.u32 %s0, 4
      %s23 = int_to_ptr.hbm [resolvable:$true] %s22
      %s24 = sshll.u32 [#allocation2], 4
      %s25 = int_to_ptr.vmem [resolvable:$true] %s24
      %30 = dma.hbm_to_vmem [thread:$0]  %s23, 256, %s25, [#allocation3], 128, 128, 8
    $region5: #{tpu_custom_call.1} parent=1 // pred_fallthru
      _
    // Predicated region
    $region6: #{tpu_custom_call.1} parent=1 // pred_check
      _
    $region7: #{tpu_custom_call.1} parent=1 // pred_check_branch
      %32 = sbr.rel (0) target = $region9
    $region8: #{tpu_custom_call.1} parent=1 // pred_region
      %34 = vsyncadd [#allocation6], 0
      %s35 = sshll.u32 %s1, 4
      %s36 = int_to_ptr.hbm [resolvable:$true] %s35
      %s37 = sshll.u32 [#allocation5], 4
      %s38 = int_to_ptr.vmem [resolvable:$true] %s37
      %43 = dma.hbm_to_vmem [thread:$0]  %s36, 4096, %s38, [#allocation6], 128, 128, 8
    $region9: #{tpu_custom_call.1} parent=1 // pred_fallthru
      _
    // Predicated region
    $region10: #{tpu_custom_call.1} parent=1 // pred_check
      _
    $region11: #{tpu_custom_call.1} parent=1 // pred_check_branch
      %45 = sbr.rel (0) target = $region13
    $region12: #{tpu_custom_call.1} parent=1 // pred_region
      %47 = vsyncadd [#allocation6], 0
      %s48 = sshll.u32 %s2, 4
      %s49 = int_to_ptr.hbm [resolvable:$true] %s48
      %s50 = sshll.u32 [#allocation7], 4
      %s51 = int_to_ptr.vmem [resolvable:$true] %s50
      %56 = dma.hbm_to_vmem [thread:$0]  %s49, 256, %s51, [#allocation6], 64, 64, 4
    $region13: #{tpu_custom_call.1} parent=1 // pred_fallthru
      _
    // Predicated region
    $region14: #{tpu_custom_call.1} parent=1 // pred_check
      _
    $region15: #{tpu_custom_call.1} parent=1 // pred_check_branch
      %58 = sbr.rel (0) target = $region17
    $region16: #{tpu_custom_call.1} parent=1 // pred_region
      _
    $region17: #{tpu_custom_call.1} parent=1 // pred_fallthru
      _
    // Predicated region
    $region18: #{tpu_custom_call.1} parent=1 // pred_check
      _
    $region19: #{tpu_custom_call.1} parent=1 // pred_check_branch
      %60 = sbr.rel (0) target = $region21
    $region20: #{tpu_custom_call.1} parent=1 // pred_region
      %62 = vsyncadd [#allocation9], 0
      %s63 = sshll.u32 %s4, 4
      %s64 = int_to_ptr.hbm [resolvable:$true] %s63
      %s65 = sshll.u32 [#allocation8], 4
      %s66 = int_to_ptr.vmem [resolvable:$true] %s65
      %71 = dma.hbm_to_vmem [thread:$0]  %s64, 256, %s66, [#allocation9], 64, 64, 4
    $region21: #{tpu_custom_call.1} parent=1 // pred_fallthru
      _
    // Predicated region
    $region22: #{tpu_custom_call.1} parent=1 // pred_check
      _
    $region23: #{tpu_custom_call.1} parent=1 // pred_check_branch
      %73 = sbr.rel (0) target = $region25
    $region24: #{tpu_custom_call.1} parent=1 // pred_region
      _
    $region25: #{tpu_custom_call.1} parent=1 // pred_fallthru
      _
    // Predicated region
    $region26: #{tpu_custom_call.1} parent=1 // pred_check
      _
    $region27: #{tpu_custom_call.1} parent=1 // pred_check_branch
      %75 = sbr.rel (0) target = $region29
    $region28: #{tpu_custom_call.1} parent=1 // pred_region
      %77 = dma.done [#allocation3], 256
    $region29: #{tpu_custom_call.1} parent=1 // pred_fallthru
      _
    // Predicated region
    $region30: #{tpu_custom_call.1} parent=1 // pred_check
      _
    $region31: #{tpu_custom_call.1} parent=1 // pred_check_branch
      %79 = sbr.rel (0) target = $region33
    $region32: #{tpu_custom_call.1} parent=1 // pred_region
      %81 = dma.done [#allocation6], 4096
    $region33: #{tpu_custom_call.1} parent=1 // pred_fallthru
      _
    // Predicated region
    $region34: #{tpu_custom_call.1} parent=1 // pred_check
      _
    $region35: #{tpu_custom_call.1} parent=1 // pred_check_branch
      %83 = sbr.rel (0) target = $region37
    $region36: #{tpu_custom_call.1} parent=1 // pred_region
      %85 = dma.done [#allocation6], 256
    $region37: #{tpu_custom_call.1} parent=1 // pred_fallthru
      _
    // Predicated region
    $region38: #{tpu_custom_call.1} parent=1 // pred_check
      _
    $region39: #{tpu_custom_call.1} parent=1 // pred_check_branch
      %87 = sbr.rel (0) target = $region41
    $region40: #{tpu_custom_call.1} parent=1 // pred_region
      %89 = dma.done [#allocation9], 256
    $region41: #{tpu_custom_call.1} parent=1 // pred_fallthru
      _
    %v91 = vld [vmem:[#allocation2] sm:$0xff]
    %v92 = vld [vmem:[#allocation2 + $0x8] sm:$0xff]
    %v93 = vpack.c.bf16 %v92, %v91
    %v94 = vld [vmem:[#allocation7] sm:$0xf]
    %v95 = vld [vmem:[#allocation7 + $0x4] sm:$0xf]
    %v96 = vld [vmem:[#allocation7 + $0x8] sm:$0xf]
    %v97 = vld [vmem:[#allocation7 + $0xc] sm:$0xf]
    %v98 = vld [vmem:[%s3] sm:$0x1]
    %v100 = vperm.slane %v98, 0
    %v106 = vunpack.c.l.b16 %v94
    %v107 = vunpack.c.l.b16 %v95
    %v108 = vunpack.c.l.b16 %v96
    %v109 = vunpack.c.l.b16 %v97
    %v110 = vpack.c.b16 %v107, %v106
    %v111 = vpack.c.b16 %v109, %v108
    %vm114 = vcmask 261120
    %v116 = vsel %vm114, %v93, 0
    %118 = vmatpush.bf16.msra.mxu0 0
    %119 = vmatpush.bf16.msra.mxu0 0
    %120 = vmatpush.bf16.msra.mxu0 0
    %121 = vmatpush.bf16.msra.mxu0 0
    %122 = vmatpush.bf16.msra.mxu0 0
    %123 = vmatpush.bf16.msra.mxu0 0
    %124 = vmatpush.bf16.msra.mxu0 %v111
    %125 = vmatpush.bf16.msra.mxu0 %v110
    %126 = vmatmul.bf16.gmra.mxu0 %v116
    %v127 = vpop.f32.mrf.mxu0
    %v128 = vadd.f32 %v100, %v127
    %v129 = vpop.f32.mrf.mxu0
    %v130 = vadd.f32 %v100, %v129
    %131 = vdwg.mxu0
    %v132 = vmax.f32 %v128, 0.0
    %v133 = vmax.f32 %v130, 0.0
    %v134 = vld [vmem:[#allocation5] sm:$0xff]
    %v135 = vld [vmem:[#allocation5 + $0x8] sm:$0xff]
    %v136 = vld [vmem:[#allocation5 + $0x10] sm:$0xff]
    %v137 = vld [vmem:[#allocation5 + $0x18] sm:$0xff]
    %v138 = vld [vmem:[#allocation5 + $0x20] sm:$0xff]
    %v139 = vld [vmem:[#allocation5 + $0x28] sm:$0xff]
    %v140 = vld [vmem:[#allocation5 + $0x30] sm:$0xff]
    %v141 = vld [vmem:[#allocation5 + $0x38] sm:$0xff]
    %v142 = vld [vmem:[#allocation5 + $0x40] sm:$0xff]
    %v143 = vld [vmem:[#allocation5 + $0x48] sm:$0xff]
    %v144 = vld [vmem:[#allocation5 + $0x50] sm:$0xff]
    %v145 = vld [vmem:[#allocation5 + $0x58] sm:$0xff]
    %v146 = vld [vmem:[#allocation5 + $0x60] sm:$0xff]
    %v147 = vld [vmem:[#allocation5 + $0x68] sm:$0xff]
    %v148 = vld [vmem:[#allocation5 + $0x70] sm:$0xff]
    %v149 = vld [vmem:[#allocation5 + $0x78] sm:$0xff]
    %v150 = vld [vmem:[#allocation5 + $0x80] sm:$0xff]
    %v151 = vld [vmem:[#allocation5 + $0x88] sm:$0xff]
    %v152 = vld [vmem:[#allocation5 + $0x90] sm:$0xff]
    %v153 = vld [vmem:[#allocation5 + $0x98] sm:$0xff]
    %v154 = vld [vmem:[#allocation5 + $0xa0] sm:$0xff]
    %v155 = vld [vmem:[#allocation5 + $0xa8] sm:$0xff]
    %v156 = vld [vmem:[#allocation5 + $0xb0] sm:$0xff]
    %v157 = vld [vmem:[#allocation5 + $0xb8] sm:$0xff]
    %v158 = vld [vmem:[#allocation5 + $0xc0] sm:$0xff]
    %v159 = vld [vmem:[#allocation5 + $0xc8] sm:$0xff]
    %v160 = vld [vmem:[#allocation5 + $0xd0] sm:$0xff]
    %v161 = vld [vmem:[#allocation5 + $0xd8] sm:$0xff]
    %v162 = vld [vmem:[#allocation5 + $0xe0] sm:$0xff]
    %v163 = vld [vmem:[#allocation5 + $0xe8] sm:$0xff]
    %v164 = vld [vmem:[#allocation5 + $0xf0] sm:$0xff]
    %v165 = vld [vmem:[#allocation5 + $0xf8] sm:$0xff]
    %v166 = vpack.c.bf16 %v135, %v134
    %v167 = vpack.c.bf16 %v137, %v136
    %v168 = vpack.c.bf16 %v139, %v138
    %v169 = vpack.c.bf16 %v141, %v140
    %v170 = vpack.c.bf16 %v143, %v142
    %v171 = vpack.c.bf16 %v145, %v144
    %v172 = vpack.c.bf16 %v147, %v146
    %v173 = vpack.c.bf16 %v149, %v148
    %v174 = vpack.c.bf16 %v151, %v150
    %v175 = vpack.c.bf16 %v153, %v152
    %v176 = vpack.c.bf16 %v155, %v154
    %v177 = vpack.c.bf16 %v157, %v156
    %v178 = vpack.c.bf16 %v159, %v158
    %v179 = vpack.c.bf16 %v161, %v160
    %v180 = vpack.c.bf16 %v163, %v162
    %v181 = vpack.c.bf16 %v165, %v164
    %v182 = vld [vmem:[#allocation8] sm:$0xf]
    %v183 = vld [vmem:[#allocation8 + $0x4] sm:$0xf]
    %v184 = vld [vmem:[#allocation8 + $0x8] sm:$0xf]
    %v185 = vld [vmem:[#allocation8 + $0xc] sm:$0xf]
    %v186 = vld [vmem:[%s5] sm:$0x1]
    %v188 = vperm.slane %v186, 0
    %v194 = vunpack.c.l.b16 %v182
    %v195 = vunpack.c.l.b16 %v183
    %v196 = vunpack.c.l.b16 %v184
    %v197 = vunpack.c.l.b16 %v185
    %v198 = vpack.c.b16 %v195, %v194
    %v199 = vpack.c.b16 %v197, %v196
    %v203 = vsel %vm114, %v166, 0
    %v206 = vsel %vm114, %v167, 0
    %v209 = vsel %vm114, %v168, 0
    %v212 = vsel %vm114, %v169, 0
    %v215 = vsel %vm114, %v170, 0
    %v218 = vsel %vm114, %v171, 0
    %v221 = vsel %vm114, %v172, 0
    %v224 = vsel %vm114, %v173, 0
    %v227 = vsel %vm114, %v174, 0
    %v230 = vsel %vm114, %v175, 0
    %v233 = vsel %vm114, %v176, 0
    %v236 = vsel %vm114, %v177, 0
    %v239 = vsel %vm114, %v178, 0
    %v242 = vsel %vm114, %v179, 0
    %v245 = vsel %vm114, %v180, 0
    %v248 = vsel %vm114, %v181, 0
    %250 = vmatpush.bf16.msra.mxu0 0
    %251 = vmatpush.bf16.msra.mxu0 0
    %252 = vmatpush.bf16.msra.mxu0 0
    %253 = vmatpush.bf16.msra.mxu0 0
    %254 = vmatpush.bf16.msra.mxu0 0
    %255 = vmatpush.bf16.msra.mxu0 0
    %256 = vmatpush.bf16.msra.mxu0 %v199
    %257 = vmatpush.bf16.msra.mxu0 %v198
    %258 = vmatmul.bf16.gmra.mxu0 %v203
    %v259 = vpop.f32.mrf.mxu0
    %v260 = vadd.f32 %v188, %v259
    %v261 = vpop.f32.mrf.mxu0
    %v262 = vadd.f32 %v188, %v261
    %263 = vmatmul.bf16.gmra.mxu0 %v206
    %v264 = vpop.f32.mrf.mxu0
    %v265 = vadd.f32 %v188, %v264
    %v266 = vpop.f32.mrf.mxu0
    %v267 = vadd.f32 %v188, %v266
    %268 = vmatmul.bf16.gmra.mxu0 %v209
    %v269 = vpop.f32.mrf.mxu0
    %v270 = vadd.f32 %v188, %v269
    %v271 = vpop.f32.mrf.mxu0
    %v272 = vadd.f32 %v188, %v271
    %273 = vmatmul.bf16.gmra.mxu0 %v212
    %v274 = vpop.f32.mrf.mxu0
    %v275 = vadd.f32 %v188, %v274
    %v276 = vpop.f32.mrf.mxu0
    %v277 = vadd.f32 %v188, %v276
    %278 = vmatmul.bf16.gmra.mxu0 %v215
    %v279 = vpop.f32.mrf.mxu0
    %v280 = vadd.f32 %v188, %v279
    %v281 = vpop.f32.mrf.mxu0
    %v282 = vadd.f32 %v188, %v281
    %283 = vmatmul.bf16.gmra.mxu0 %v218
    %v284 = vpop.f32.mrf.mxu0
    %v285 = vadd.f32 %v188, %v284
    %v286 = vpop.f32.mrf.mxu0
    %v287 = vadd.f32 %v188, %v286
    %288 = vmatmul.bf16.gmra.mxu0 %v221
    %v289 = vpop.f32.mrf.mxu0
    %v290 = vadd.f32 %v188, %v289
    %v291 = vpop.f32.mrf.mxu0
    %v292 = vadd.f32 %v188, %v291
    %293 = vmatmul.bf16.gmra.mxu0 %v224
    %v294 = vpop.f32.mrf.mxu0
    %v295 = vadd.f32 %v188, %v294
    %v296 = vpop.f32.mrf.mxu0
    %v297 = vadd.f32 %v188, %v296
    %298 = vmatmul.bf16.gmra.mxu0 %v227
    %v299 = vpop.f32.mrf.mxu0
    %v300 = vadd.f32 %v188, %v299
    %v301 = vpop.f32.mrf.mxu0
    %v302 = vadd.f32 %v188, %v301
    %303 = vmatmul.bf16.gmra.mxu0 %v230
    %v304 = vpop.f32.mrf.mxu0
    %v305 = vadd.f32 %v188, %v304
    %v306 = vpop.f32.mrf.mxu0
    %v307 = vadd.f32 %v188, %v306
    %308 = vmatmul.bf16.gmra.mxu0 %v233
    %v309 = vpop.f32.mrf.mxu0
    %v310 = vadd.f32 %v188, %v309
    %v311 = vpop.f32.mrf.mxu0
    %v312 = vadd.f32 %v188, %v311
    %313 = vmatmul.bf16.gmra.mxu0 %v236
    %v314 = vpop.f32.mrf.mxu0
    %v315 = vadd.f32 %v188, %v314
    %v316 = vpop.f32.mrf.mxu0
    %v317 = vadd.f32 %v188, %v316
    %318 = vmatmul.bf16.gmra.mxu0 %v239
    %v319 = vpop.f32.mrf.mxu0
    %v320 = vadd.f32 %v188, %v319
    %v321 = vpop.f32.mrf.mxu0
    %v322 = vadd.f32 %v188, %v321
    %323 = vmatmul.bf16.gmra.mxu0 %v242
    %v324 = vpop.f32.mrf.mxu0
    %v325 = vadd.f32 %v188, %v324
    %v326 = vpop.f32.mrf.mxu0
    %v327 = vadd.f32 %v188, %v326
    %328 = vmatmul.bf16.gmra.mxu0 %v245
    %v329 = vpop.f32.mrf.mxu0
    %v330 = vadd.f32 %v188, %v329
    %v331 = vpop.f32.mrf.mxu0
    %v332 = vadd.f32 %v188, %v331
    %333 = vmatmul.bf16.gmra.mxu0 %v248
    %v334 = vpop.f32.mrf.mxu0
    %v335 = vadd.f32 %v188, %v334
    %v336 = vpop.f32.mrf.mxu0
    %v337 = vadd.f32 %v188, %v336
    %338 = vdwg.mxu0
    %v339 = vmax.f32 %v260, 0.0
    %v340 = vmax.f32 %v262, 0.0
    %v341 = vmax.f32 %v265, 0.0
    %v342 = vmax.f32 %v267, 0.0
    %v343 = vmax.f32 %v270, 0.0
    %v344 = vmax.f32 %v272, 0.0
    %v345 = vmax.f32 %v275, 0.0
    %v346 = vmax.f32 %v277, 0.0
    %v347 = vmax.f32 %v280, 0.0
    %v348 = vmax.f32 %v282, 0.0
    %v349 = vmax.f32 %v285, 0.0
    %v350 = vmax.f32 %v287, 0.0
    %v351 = vmax.f32 %v290, 0.0
    %v352 = vmax.f32 %v292, 0.0
    %v353 = vmax.f32 %v295, 0.0
    %v354 = vmax.f32 %v297, 0.0
    %v355 = vmax.f32 %v300, 0.0
    %v356 = vmax.f32 %v302, 0.0
    %v357 = vmax.f32 %v305, 0.0
    %v358 = vmax.f32 %v307, 0.0
    %v359 = vmax.f32 %v310, 0.0
    %v360 = vmax.f32 %v312, 0.0
    %v361 = vmax.f32 %v315, 0.0
    %v362 = vmax.f32 %v317, 0.0
    %v363 = vmax.f32 %v320, 0.0
    %v364 = vmax.f32 %v322, 0.0
    %v365 = vmax.f32 %v325, 0.0
    %v366 = vmax.f32 %v327, 0.0
    %v367 = vmax.f32 %v330, 0.0
    %v368 = vmax.f32 %v332, 0.0
    %v369 = vmax.f32 %v335, 0.0
    %v370 = vmax.f32 %v337, 0.0
    %v373 = vrot.slane %v132, 1
    %v374 = vrot.slane %v132, 2
    %v375 = vrot.slane %v132, 3
    %v376 = vrot.slane %v132, 4
    %v377 = vrot.slane %v132, 5
    %v378 = vrot.slane %v132, 6
    %v379 = vrot.slane %v132, 7
    %v380 = vrot.slane %v133, 1
    %v381 = vrot.slane %v133, 2
    %v382 = vrot.slane %v133, 3
    %v383 = vrot.slane %v133, 4
    %v384 = vrot.slane %v133, 5
    %v385 = vrot.slane %v133, 6
    %v386 = vrot.slane %v133, 7
    %v387 = vperm.slane %v132, 0
    %v388 = vperm.slane %v373, 0
    %v389 = vperm.slane %v374, 0
    %v390 = vperm.slane %v375, 0
    %v391 = vperm.slane %v376, 0
    %v392 = vperm.slane %v377, 0
    %v393 = vperm.slane %v378, 0
    %v394 = vperm.slane %v379, 0
    %v395 = vperm.slane %v133, 0
    %v396 = vperm.slane %v380, 0
    %v397 = vperm.slane %v381, 0
    %v398 = vperm.slane %v382, 0
    %v399 = vperm.slane %v383, 0
    %v400 = vperm.slane %v384, 0
    %v401 = vperm.slane %v385, 0
    %v402 = vperm.slane %v386, 0
    %v419 = vmul.f32 %v387, %v339
    %v420 = vmul.f32 %v387, %v340
    %v421 = vmul.f32 %v388, %v341
    %v422 = vmul.f32 %v388, %v342
    %v423 = vmul.f32 %v389, %v343
    %v424 = vmul.f32 %v389, %v344
    %v425 = vmul.f32 %v390, %v345
    %v426 = vmul.f32 %v390, %v346
    %v427 = vmul.f32 %v391, %v347
    %v428 = vmul.f32 %v391, %v348
    %v429 = vmul.f32 %v392, %v349
    %v430 = vmul.f32 %v392, %v350
    %v431 = vmul.f32 %v393, %v351
    %v432 = vmul.f32 %v393, %v352
    %v433 = vmul.f32 %v394, %v353
    %v434 = vmul.f32 %v394, %v354
    %v435 = vmul.f32 %v395, %v355
    %v436 = vmul.f32 %v395, %v356
    %v437 = vmul.f32 %v396, %v357
    %v438 = vmul.f32 %v396, %v358
    %v439 = vmul.f32 %v397, %v359
    %v440 = vmul.f32 %v397, %v360
    %v441 = vmul.f32 %v398, %v361
    %v442 = vmul.f32 %v398, %v362
    %v443 = vmul.f32 %v399, %v363
    %v444 = vmul.f32 %v399, %v364
    %v445 = vmul.f32 %v400, %v365
    %v446 = vmul.f32 %v400, %v366
    %v447 = vmul.f32 %v401, %v367
    %v448 = vmul.f32 %v401, %v368
    %v449 = vmul.f32 %v402, %v369
    %v450 = vmul.f32 %v402, %v370
    %v451 = vsel %vm114, %v419, 0.0
    %452 = vadd.xlane.f32.xlu0 %v451
    %v453 = vpop.xlane.xlu0 %452
    %v454 = vsel %vm114, %v420, 0.0
    %455 = vadd.xlane.f32.xlu0 %v454
    %v456 = vpop.xlane.xlu0 %455
    %v457 = vsel %vm114, %v421, 0.0
    %458 = vadd.xlane.f32.xlu0 %v457
    %v459 = vpop.xlane.xlu0 %458
    %v460 = vsel %vm114, %v422, 0.0
    %461 = vadd.xlane.f32.xlu0 %v460
    %v462 = vpop.xlane.xlu0 %461
    %v463 = vsel %vm114, %v423, 0.0
    %464 = vadd.xlane.f32.xlu0 %v463
    %v465 = vpop.xlane.xlu0 %464
    %v466 = vsel %vm114, %v424, 0.0
    %467 = vadd.xlane.f32.xlu0 %v466
    %v468 = vpop.xlane.xlu0 %467
    %v469 = vsel %vm114, %v425, 0.0
    %470 = vadd.xlane.f32.xlu0 %v469
    %v471 = vpop.xlane.xlu0 %470
    %v472 = vsel %vm114, %v426, 0.0
    %473 = vadd.xlane.f32.xlu0 %v472
    %v474 = vpop.xlane.xlu0 %473
    %v475 = vsel %vm114, %v427, 0.0
    %476 = vadd.xlane.f32.xlu0 %v475
    %v477 = vpop.xlane.xlu0 %476
    %v478 = vsel %vm114, %v428, 0.0
    %479 = vadd.xlane.f32.xlu0 %v478
    %v480 = vpop.xlane.xlu0 %479
    %v481 = vsel %vm114, %v429, 0.0
    %482 = vadd.xlane.f32.xlu0 %v481
    %v483 = vpop.xlane.xlu0 %482
    %v484 = vsel %vm114, %v430, 0.0
    %485 = vadd.xlane.f32.xlu0 %v484
    %v486 = vpop.xlane.xlu0 %485
    %v487 = vsel %vm114, %v431, 0.0
    %488 = vadd.xlane.f32.xlu0 %v487
    %v489 = vpop.xlane.xlu0 %488
    %v490 = vsel %vm114, %v432, 0.0
    %491 = vadd.xlane.f32.xlu0 %v490
    %v492 = vpop.xlane.xlu0 %491
    %v493 = vsel %vm114, %v433, 0.0
    %494 = vadd.xlane.f32.xlu0 %v493
    %v495 = vpop.xlane.xlu0 %494
    %v496 = vsel %vm114, %v434, 0.0
    %497 = vadd.xlane.f32.xlu0 %v496
    %v498 = vpop.xlane.xlu0 %497
    %v499 = vsel %vm114, %v435, 0.0
    %500 = vadd.xlane.f32.xlu0 %v499
    %v501 = vpop.xlane.xlu0 %500
    %v502 = vsel %vm114, %v436, 0.0
    %503 = vadd.xlane.f32.xlu0 %v502
    %v504 = vpop.xlane.xlu0 %503
    %v505 = vsel %vm114, %v437, 0.0
    %506 = vadd.xlane.f32.xlu0 %v505
    %v507 = vpop.xlane.xlu0 %506
    %v508 = vsel %vm114, %v438, 0.0
    %509 = vadd.xlane.f32.xlu0 %v508
    %v510 = vpop.xlane.xlu0 %509
    %v511 = vsel %vm114, %v439, 0.0
    %512 = vadd.xlane.f32.xlu0 %v511
    %v513 = vpop.xlane.xlu0 %512
    %v514 = vsel %vm114, %v440, 0.0
    %515 = vadd.xlane.f32.xlu0 %v514
    %v516 = vpop.xlane.xlu0 %515
    %v517 = vsel %vm114, %v441, 0.0
    %518 = vadd.xlane.f32.xlu0 %v517
    %v519 = vpop.xlane.xlu0 %518
    %v520 = vsel %vm114, %v442, 0.0
    %521 = vadd.xlane.f32.xlu0 %v520
    %v522 = vpop.xlane.xlu0 %521
    %v523 = vsel %vm114, %v443, 0.0
    %524 = vadd.xlane.f32.xlu0 %v523
    %v525 = vpop.xlane.xlu0 %524
    %v526 = vsel %vm114, %v444, 0.0
    %527 = vadd.xlane.f32.xlu0 %v526
    %v528 = vpop.xlane.xlu0 %527
    %v529 = vsel %vm114, %v445, 0.0
    %530 = vadd.xlane.f32.xlu0 %v529
    %v531 = vpop.xlane.xlu0 %530
    %v532 = vsel %vm114, %v446, 0.0
    %533 = vadd.xlane.f32.xlu0 %v532
    %v534 = vpop.xlane.xlu0 %533
    %v535 = vsel %vm114, %v447, 0.0
    %536 = vadd.xlane.f32.xlu0 %v535
    %v537 = vpop.xlane.xlu0 %536
    %v538 = vsel %vm114, %v448, 0.0
    %539 = vadd.xlane.f32.xlu0 %v538
    %v540 = vpop.xlane.xlu0 %539
    %v541 = vsel %vm114, %v449, 0.0
    %542 = vadd.xlane.f32.xlu0 %v541
    %v543 = vpop.xlane.xlu0 %542
    %v544 = vsel %vm114, %v450, 0.0
    %545 = vadd.xlane.f32.xlu0 %v544
    %v546 = vpop.xlane.xlu0 %545
    %v579 = vlaneseq
    %v580 = vand.u32 %v579, 127
    %v581 = vperm.slane %v453, %v580
    %v582 = vadd.s32 %v580, 4294967288
    %v583 = vperm.slane %v456, %v582
    %vm584 = vcmask 130112
    %v585 = vsel %vm584, %v583, %v581
    %v586 = vperm.slane %v459, %v580
    %v587 = vperm.slane %v462, %v582
    %v588 = vsel %vm584, %v587, %v586
    %v589 = vperm.slane %v465, %v580
    %v590 = vperm.slane %v468, %v582
    %v591 = vsel %vm584, %v590, %v589
    %v592 = vperm.slane %v471, %v580
    %v593 = vperm.slane %v474, %v582
    %v594 = vsel %vm584, %v593, %v592
    %v595 = vperm.slane %v477, %v580
    %v596 = vperm.slane %v480, %v582
    %v597 = vsel %vm584, %v596, %v595
    %v598 = vperm.slane %v483, %v580
    %v599 = vperm.slane %v486, %v582
    %v600 = vsel %vm584, %v599, %v598
    %v601 = vperm.slane %v489, %v580
    %v602 = vperm.slane %v492, %v582
    %v603 = vsel %vm584, %v602, %v601
    %v604 = vperm.slane %v495, %v580
    %v605 = vperm.slane %v498, %v582
    %v606 = vsel %vm584, %v605, %v604
    %v607 = vperm.slane %v501, %v580
    %v608 = vperm.slane %v504, %v582
    %v609 = vsel %vm584, %v608, %v607
    %v610 = vperm.slane %v507, %v580
    %v611 = vperm.slane %v510, %v582
    %v612 = vsel %vm584, %v611, %v610
    %v613 = vperm.slane %v513, %v580
    %v614 = vperm.slane %v516, %v582
    %v615 = vsel %vm584, %v614, %v613
    %v616 = vperm.slane %v519, %v580
    %v617 = vperm.slane %v522, %v582
    %v618 = vsel %vm584, %v617, %v616
    %v619 = vperm.slane %v525, %v580
    %v620 = vperm.slane %v528, %v582
    %v621 = vsel %vm584, %v620, %v619
    %v622 = vperm.slane %v531, %v580
    %v623 = vperm.slane %v534, %v582
    %v624 = vsel %vm584, %v623, %v622
    %v625 = vperm.slane %v537, %v580
    %v626 = vperm.slane %v540, %v582
    %v627 = vsel %vm584, %v626, %v625
    %v628 = vperm.slane %v543, %v580
    %v629 = vperm.slane %v546, %v582
    %v630 = vsel %vm584, %v629, %v628
    %vm631 = vcmask 1041409
    %v632 = vsel %vm631, %v588, %v585
    %vm633 = vcmask 1042434
    %v634 = vsel %vm633, %v591, %v632
    %vm635 = vcmask 1043459
    %v636 = vsel %vm635, %v594, %v634
    %vm637 = vcmask 1044484
    %v638 = vsel %vm637, %v597, %v636
    %vm639 = vcmask 1045509
    %v640 = vsel %vm639, %v600, %v638
    %vm641 = vcmask 1046534
    %v642 = vsel %vm641, %v603, %v640
    %vm643 = vcmask 1047559
    %v644 = vsel %vm643, %v606, %v642
    %v645 = vsel %vm631, %v612, %v609
    %v646 = vsel %vm633, %v615, %v645
    %v647 = vsel %vm635, %v618, %v646
    %v648 = vsel %vm637, %v621, %v647
    %v649 = vsel %vm639, %v624, %v648
    %v650 = vsel %vm641, %v627, %v649
    %v651 = vsel %vm643, %v630, %v650
    %vm654 = vcmask 130048
    %v655 = vsel %vm654, %v644, -inf
    %656 = vmax.xlane.f32.xlu0 %v655
    %v657 = vpop.xlane.xlu0 %656
    %v658 = vsel %vm654, %v651, -inf
    %659 = vmax.xlane.f32.xlu0 %v658
    %v660 = vpop.xlane.xlu0 %659
    %v663 = vperm.slane %v657, 0
    %v664 = vperm.slane %v657, 1
    %v665 = vperm.slane %v657, 2
    %v666 = vperm.slane %v657, 3
    %v667 = vperm.slane %v657, 4
    %v668 = vperm.slane %v657, 5
    %v669 = vperm.slane %v657, 6
    %v670 = vperm.slane %v657, 7
    %v671 = vperm.slane %v660, 0
    %v672 = vperm.slane %v660, 1
    %v673 = vperm.slane %v660, 2
    %v674 = vperm.slane %v660, 3
    %v675 = vperm.slane %v660, 4
    %v676 = vperm.slane %v660, 5
    %v677 = vperm.slane %v660, 6
    %v678 = vperm.slane %v660, 7
    %v695 = vsub.f32 %v453, %v663
    %v696 = vsub.f32 %v456, %v663
    %v697 = vsub.f32 %v459, %v664
    %v698 = vsub.f32 %v462, %v664
    %v699 = vsub.f32 %v465, %v665
    %v700 = vsub.f32 %v468, %v665
    %v701 = vsub.f32 %v471, %v666
    %v702 = vsub.f32 %v474, %v666
    %v703 = vsub.f32 %v477, %v667
    %v704 = vsub.f32 %v480, %v667
    %v705 = vsub.f32 %v483, %v668
    %v706 = vsub.f32 %v486, %v668
    %v707 = vsub.f32 %v489, %v669
    %v708 = vsub.f32 %v492, %v669
    %v709 = vsub.f32 %v495, %v670
    %v710 = vsub.f32 %v498, %v670
    %v711 = vsub.f32 %v501, %v671
    %v712 = vsub.f32 %v504, %v671
    %v713 = vsub.f32 %v507, %v672
    %v714 = vsub.f32 %v510, %v672
    %v715 = vsub.f32 %v513, %v673
    %v716 = vsub.f32 %v516, %v673
    %v717 = vsub.f32 %v519, %v674
    %v718 = vsub.f32 %v522, %v674
    %v719 = vsub.f32 %v525, %v675
    %v720 = vsub.f32 %v528, %v675
    %v721 = vsub.f32 %v531, %v676
    %v722 = vsub.f32 %v534, %v676
    %v723 = vsub.f32 %v537, %v677
    %v724 = vsub.f32 %v540, %v677
    %v725 = vsub.f32 %v543, %v678
    %v726 = vsub.f32 %v546, %v678
    %v727 = vmul.f32 %v695, 1.442695
    %v728 = vpow.pop %v727
    %v729 = vmul.f32 %v696, 1.442695
    %v730 = vpow.pop %v729
    %v731 = vmul.f32 %v697, 1.442695
    %v732 = vpow.pop %v731
    %v733 = vmul.f32 %v698, 1.442695
    %v734 = vpow.pop %v733
    %v735 = vmul.f32 %v699, 1.442695
    %v736 = vpow.pop %v735
    %v737 = vmul.f32 %v700, 1.442695
    %v738 = vpow.pop %v737
    %v739 = vmul.f32 %v701, 1.442695
    %v740 = vpow.pop %v739
    %v741 = vmul.f32 %v702, 1.442695
    %v742 = vpow.pop %v741
    %v743 = vmul.f32 %v703, 1.442695
    %v744 = vpow.pop %v743
    %v745 = vmul.f32 %v704, 1.442695
    %v746 = vpow.pop %v745
    %v747 = vmul.f32 %v705, 1.442695
    %v748 = vpow.pop %v747
    %v749 = vmul.f32 %v706, 1.442695
    %v750 = vpow.pop %v749
    %v751 = vmul.f32 %v707, 1.442695
    %v752 = vpow.pop %v751
    %v753 = vmul.f32 %v708, 1.442695
    %v754 = vpow.pop %v753
    %v755 = vmul.f32 %v709, 1.442695
    %v756 = vpow.pop %v755
    %v757 = vmul.f32 %v710, 1.442695
    %v758 = vpow.pop %v757
    %v759 = vmul.f32 %v711, 1.442695
    %v760 = vpow.pop %v759
    %v761 = vmul.f32 %v712, 1.442695
    %v762 = vpow.pop %v761
    %v763 = vmul.f32 %v713, 1.442695
    %v764 = vpow.pop %v763
    %v765 = vmul.f32 %v714, 1.442695
    %v766 = vpow.pop %v765
    %v767 = vmul.f32 %v715, 1.442695
    %v768 = vpow.pop %v767
    %v769 = vmul.f32 %v716, 1.442695
    %v770 = vpow.pop %v769
    %v771 = vmul.f32 %v717, 1.442695
    %v772 = vpow.pop %v771
    %v773 = vmul.f32 %v718, 1.442695
    %v774 = vpow.pop %v773
    %v775 = vmul.f32 %v719, 1.442695
    %v776 = vpow.pop %v775
    %v777 = vmul.f32 %v720, 1.442695
    %v778 = vpow.pop %v777
    %v779 = vmul.f32 %v721, 1.442695
    %v780 = vpow.pop %v779
    %v781 = vmul.f32 %v722, 1.442695
    %v782 = vpow.pop %v781
    %v783 = vmul.f32 %v723, 1.442695
    %v784 = vpow.pop %v783
    %v785 = vmul.f32 %v724, 1.442695
    %v786 = vpow.pop %v785
    %v787 = vmul.f32 %v725, 1.442695
    %v788 = vpow.pop %v787
    %v789 = vmul.f32 %v726, 1.442695
    %v790 = vpow.pop %v789
    %823 = vset.pattern.permute.xlu0 0
    %824 = vperm.xlu0 %823, %v728
    %v825 = vpop.permute.xlu0 %824
    %826 = vset.pattern.permute.xlu0 0
    %827 = vperm.xlu0 %826, %v730
    %v828 = vpop.permute.xlu0 %827
    %829 = vset.pattern.permute.xlu0 0
    %830 = vperm.xlu0 %829, %v732
    %v831 = vpop.permute.xlu0 %830
    %832 = vset.pattern.permute.xlu0 0
    %833 = vperm.xlu0 %832, %v734
    %v834 = vpop.permute.xlu0 %833
    %835 = vset.pattern.permute.xlu0 0
    %836 = vperm.xlu0 %835, %v736
    %v837 = vpop.permute.xlu0 %836
    %838 = vset.pattern.permute.xlu0 0
    %839 = vperm.xlu0 %838, %v738
    %v840 = vpop.permute.xlu0 %839
    %841 = vset.pattern.permute.xlu0 0
    %842 = vperm.xlu0 %841, %v740
    %v843 = vpop.permute.xlu0 %842
    %844 = vset.pattern.permute.xlu0 0
    %845 = vperm.xlu0 %844, %v742
    %v846 = vpop.permute.xlu0 %845
    %847 = vset.pattern.permute.xlu0 0
    %848 = vperm.xlu0 %847, %v744
    %v849 = vpop.permute.xlu0 %848
    %850 = vset.pattern.permute.xlu0 0
    %851 = vperm.xlu0 %850, %v746
    %v852 = vpop.permute.xlu0 %851
    %853 = vset.pattern.permute.xlu0 0
    %854 = vperm.xlu0 %853, %v748
    %v855 = vpop.permute.xlu0 %854
    %856 = vset.pattern.permute.xlu0 0
    %857 = vperm.xlu0 %856, %v750
    %v858 = vpop.permute.xlu0 %857
    %859 = vset.pattern.permute.xlu0 0
    %860 = vperm.xlu0 %859, %v752
    %v861 = vpop.permute.xlu0 %860
    %862 = vset.pattern.permute.xlu0 0
    %863 = vperm.xlu0 %862, %v754
    %v864 = vpop.permute.xlu0 %863
    %865 = vset.pattern.permute.xlu0 0
    %866 = vperm.xlu0 %865, %v756
    %v867 = vpop.permute.xlu0 %866
    %868 = vset.pattern.permute.xlu0 0
    %869 = vperm.xlu0 %868, %v758
    %v870 = vpop.permute.xlu0 %869
    %871 = vset.pattern.permute.xlu0 0
    %872 = vperm.xlu0 %871, %v760
    %v873 = vpop.permute.xlu0 %872
    %874 = vset.pattern.permute.xlu0 0
    %875 = vperm.xlu0 %874, %v762
    %v876 = vpop.permute.xlu0 %875
    %877 = vset.pattern.permute.xlu0 0
    %878 = vperm.xlu0 %877, %v764
    %v879 = vpop.permute.xlu0 %878
    %880 = vset.pattern.permute.xlu0 0
    %881 = vperm.xlu0 %880, %v766
    %v882 = vpop.permute.xlu0 %881
    %883 = vset.pattern.permute.xlu0 0
    %884 = vperm.xlu0 %883, %v768
    %v885 = vpop.permute.xlu0 %884
    %886 = vset.pattern.permute.xlu0 0
    %887 = vperm.xlu0 %886, %v770
    %v888 = vpop.permute.xlu0 %887
    %889 = vset.pattern.permute.xlu0 0
    %890 = vperm.xlu0 %889, %v772
    %v891 = vpop.permute.xlu0 %890
    %892 = vset.pattern.permute.xlu0 0
    %893 = vperm.xlu0 %892, %v774
    %v894 = vpop.permute.xlu0 %893
    %895 = vset.pattern.permute.xlu0 0
    %896 = vperm.xlu0 %895, %v776
    %v897 = vpop.permute.xlu0 %896
    %898 = vset.pattern.permute.xlu0 0
    %899 = vperm.xlu0 %898, %v778
    %v900 = vpop.permute.xlu0 %899
    %901 = vset.pattern.permute.xlu0 0
    %902 = vperm.xlu0 %901, %v780
    %v903 = vpop.permute.xlu0 %902
    %904 = vset.pattern.permute.xlu0 0
    %905 = vperm.xlu0 %904, %v782
    %v906 = vpop.permute.xlu0 %905
    %907 = vset.pattern.permute.xlu0 0
    %908 = vperm.xlu0 %907, %v784
    %v909 = vpop.permute.xlu0 %908
    %910 = vset.pattern.permute.xlu0 0
    %911 = vperm.xlu0 %910, %v786
    %v912 = vpop.permute.xlu0 %911
    %913 = vset.pattern.permute.xlu0 0
    %914 = vperm.xlu0 %913, %v788
    %v915 = vpop.permute.xlu0 %914
    %916 = vset.pattern.permute.xlu0 0
    %917 = vperm.xlu0 %916, %v790
    %v918 = vpop.permute.xlu0 %917
    %v919 = vperm.slane %v825, %v580
    %v920 = vperm.slane %v828, %v582
    %v921 = vsel %vm584, %v920, %v919
    %v922 = vperm.slane %v831, %v580
    %v923 = vperm.slane %v834, %v582
    %v924 = vsel %vm584, %v923, %v922
    %v925 = vperm.slane %v837, %v580
    %v926 = vperm.slane %v840, %v582
    %v927 = vsel %vm584, %v926, %v925
    %v928 = vperm.slane %v843, %v580
    %v929 = vperm.slane %v846, %v582
    %v930 = vsel %vm584, %v929, %v928
    %v931 = vperm.slane %v849, %v580
    %v932 = vperm.slane %v852, %v582
    %v933 = vsel %vm584, %v932, %v931
    %v934 = vperm.slane %v855, %v580
    %v935 = vperm.slane %v858, %v582
    %v936 = vsel %vm584, %v935, %v934
    %v937 = vperm.slane %v861, %v580
    %v938 = vperm.slane %v864, %v582
    %v939 = vsel %vm584, %v938, %v937
    %v940 = vperm.slane %v867, %v580
    %v941 = vperm.slane %v870, %v582
    %v942 = vsel %vm584, %v941, %v940
    %v943 = vperm.slane %v873, %v580
    %v944 = vperm.slane %v876, %v582
    %v945 = vsel %vm584, %v944, %v943
    %v946 = vperm.slane %v879, %v580
    %v947 = vperm.slane %v882, %v582
    %v948 = vsel %vm584, %v947, %v946
    %v949 = vperm.slane %v885, %v580
    %v950 = vperm.slane %v888, %v582
    %v951 = vsel %vm584, %v950, %v949
    %v952 = vperm.slane %v891, %v580
    %v953 = vperm.slane %v894, %v582
    %v954 = vsel %vm584, %v953, %v952
    %v955 = vperm.slane %v897, %v580
    %v956 = vperm.slane %v900, %v582
    %v957 = vsel %vm584, %v956, %v955
    %v958 = vperm.slane %v903, %v580
    %v959 = vperm.slane %v906, %v582
    %v960 = vsel %vm584, %v959, %v958
    %v961 = vperm.slane %v909, %v580
    %v962 = vperm.slane %v912, %v582
    %v963 = vsel %vm584, %v962, %v961
    %v964 = vperm.slane %v915, %v580
    %v965 = vperm.slane %v918, %v582
    %v966 = vsel %vm584, %v965, %v964
    %v967 = vsel %vm631, %v924, %v921
    %v968 = vsel %vm633, %v927, %v967
    %v969 = vsel %vm635, %v930, %v968
    %v970 = vsel %vm637, %v933, %v969
    %v971 = vsel %vm639, %v936, %v970
    %v972 = vsel %vm641, %v939, %v971
    %v973 = vsel %vm643, %v942, %v972
    %v974 = vsel %vm631, %v948, %v945
    %v975 = vsel %vm633, %v951, %v974
    %v976 = vsel %vm635, %v954, %v975
    %v977 = vsel %vm637, %v957, %v976
    %v978 = vsel %vm639, %v960, %v977
    %v979 = vsel %vm641, %v963, %v978
    %v980 = vsel %vm643, %v966, %v979
    %v983 = vsel %vm654, %v973, 0.0
    %984 = vadd.xlane.f32.xlu0 %v983
    %v985 = vpop.xlane.xlu0 %984
    %v986 = vsel %vm654, %v980, 0.0
    %987 = vadd.xlane.f32.xlu0 %v986
    %v988 = vpop.xlane.xlu0 %987
    %v991 = vperm.slane %v985, 0
    %v992 = vperm.slane %v985, 1
    %v993 = vperm.slane %v985, 2
    %v994 = vperm.slane %v985, 3
    %v995 = vperm.slane %v985, 4
    %v996 = vperm.slane %v985, 5
    %v997 = vperm.slane %v985, 6
    %v998 = vperm.slane %v985, 7
    %v999 = vperm.slane %v988, 0
    %v1000 = vperm.slane %v988, 1
    %v1001 = vperm.slane %v988, 2
    %v1002 = vperm.slane %v988, 3
    %v1003 = vperm.slane %v988, 4
    %v1004 = vperm.slane %v988, 5
    %v1005 = vperm.slane %v988, 6
    %v1006 = vperm.slane %v988, 7
    %v1023 = vrcp.pop %v991
    %v1024 = vmul.f32 %v991, %v1023
    %v1025 = vsub.f32 1.0, %v1024
    %v1026 = vmul.f32 %v1023, %v1025
    %v1027 = vadd.f32 %v1023, %v1026
    %vm1028 = vweird.f32 %v991
    %vm1029 = vweird.f32 %v1023
    %vm1030 = vmor %vm1028, %vm1029
    %v1031 = vsel %vm1030, %v1023, %v1027
    %v1032 = vand.u32 2147483647, %v991
    %vm1033 = vcmp.eq.f32.partialorder %v1032, 8.507059e+37
    %v1034 = vand.u32 %v991, 2147483648
    %v1035 = vor.u32 1.1754944e-38, %v1034
    %v1036 = vsel %vm1033, %v1035, %v1031
    %v1037 = vmul.f32 %v728, %v1036
    %v1038 = vmul.f32 %v730, %v1036
    %v1039 = vrcp.pop %v992
    %v1040 = vmul.f32 %v992, %v1039
    %v1041 = vsub.f32 1.0, %v1040
    %v1042 = vmul.f32 %v1039, %v1041
    %v1043 = vadd.f32 %v1039, %v1042
    %vm1044 = vweird.f32 %v992
    %vm1045 = vweird.f32 %v1039
    %vm1046 = vmor %vm1044, %vm1045
    %v1047 = vsel %vm1046, %v1039, %v1043
    %v1048 = vand.u32 2147483647, %v992
    %vm1049 = vcmp.eq.f32.partialorder %v1048, 8.507059e+37
    %v1050 = vand.u32 %v992, 2147483648
    %v1051 = vor.u32 1.1754944e-38, %v1050
    %v1052 = vsel %vm1049, %v1051, %v1047
    %v1053 = vmul.f32 %v732, %v1052
    %v1054 = vmul.f32 %v734, %v1052
    %v1055 = vrcp.pop %v993
    %v1056 = vmul.f32 %v993, %v1055
    %v1057 = vsub.f32 1.0, %v1056
    %v1058 = vmul.f32 %v1055, %v1057
    %v1059 = vadd.f32 %v1055, %v1058
    %vm1060 = vweird.f32 %v993
    %vm1061 = vweird.f32 %v1055
    %vm1062 = vmor %vm1060, %vm1061
    %v1063 = vsel %vm1062, %v1055, %v1059
    %v1064 = vand.u32 2147483647, %v993
    %vm1065 = vcmp.eq.f32.partialorder %v1064, 8.507059e+37
    %v1066 = vand.u32 %v993, 2147483648
    %v1067 = vor.u32 1.1754944e-38, %v1066
    %v1068 = vsel %vm1065, %v1067, %v1063
    %v1069 = vmul.f32 %v736, %v1068
    %v1070 = vmul.f32 %v738, %v1068
    %v1071 = vrcp.pop %v994
    %v1072 = vmul.f32 %v994, %v1071
    %v1073 = vsub.f32 1.0, %v1072
    %v1074 = vmul.f32 %v1071, %v1073
    %v1075 = vadd.f32 %v1071, %v1074
    %vm1076 = vweird.f32 %v994
    %vm1077 = vweird.f32 %v1071
    %vm1078 = vmor %vm1076, %vm1077
    %v1079 = vsel %vm1078, %v1071, %v1075
    %v1080 = vand.u32 2147483647, %v994
    %vm1081 = vcmp.eq.f32.partialorder %v1080, 8.507059e+37
    %v1082 = vand.u32 %v994, 2147483648
    %v1083 = vor.u32 1.1754944e-38, %v1082
    %v1084 = vsel %vm1081, %v1083, %v1079
    %v1085 = vmul.f32 %v740, %v1084
    %v1086 = vmul.f32 %v742, %v1084
    %v1087 = vrcp.pop %v995
    %v1088 = vmul.f32 %v995, %v1087
    %v1089 = vsub.f32 1.0, %v1088
    %v1090 = vmul.f32 %v1087, %v1089
    %v1091 = vadd.f32 %v1087, %v1090
    %vm1092 = vweird.f32 %v995
    %vm1093 = vweird.f32 %v1087
    %vm1094 = vmor %vm1092, %vm1093
    %v1095 = vsel %vm1094, %v1087, %v1091
    %v1096 = vand.u32 2147483647, %v995
    %vm1097 = vcmp.eq.f32.partialorder %v1096, 8.507059e+37
    %v1098 = vand.u32 %v995, 2147483648
    %v1099 = vor.u32 1.1754944e-38, %v1098
    %v1100 = vsel %vm1097, %v1099, %v1095
    %v1101 = vmul.f32 %v744, %v1100
    %v1102 = vmul.f32 %v746, %v1100
    %v1103 = vrcp.pop %v996
    %v1104 = vmul.f32 %v996, %v1103
    %v1105 = vsub.f32 1.0, %v1104
    %v1106 = vmul.f32 %v1103, %v1105
    %v1107 = vadd.f32 %v1103, %v1106
    %vm1108 = vweird.f32 %v996
    %vm1109 = vweird.f32 %v1103
    %vm1110 = vmor %vm1108, %vm1109
    %v1111 = vsel %vm1110, %v1103, %v1107
    %v1112 = vand.u32 2147483647, %v996
    %vm1113 = vcmp.eq.f32.partialorder %v1112, 8.507059e+37
    %v1114 = vand.u32 %v996, 2147483648
    %v1115 = vor.u32 1.1754944e-38, %v1114
    %v1116 = vsel %vm1113, %v1115, %v1111
    %v1117 = vmul.f32 %v748, %v1116
    %v1118 = vmul.f32 %v750, %v1116
    %v1119 = vrcp.pop %v997
    %v1120 = vmul.f32 %v997, %v1119
    %v1121 = vsub.f32 1.0, %v1120
    %v1122 = vmul.f32 %v1119, %v1121
    %v1123 = vadd.f32 %v1119, %v1122
    %vm1124 = vweird.f32 %v997
    %vm1125 = vweird.f32 %v1119
    %vm1126 = vmor %vm1124, %vm1125
    %v1127 = vsel %vm1126, %v1119, %v1123
    %v1128 = vand.u32 2147483647, %v997
    %vm1129 = vcmp.eq.f32.partialorder %v1128, 8.507059e+37
    %v1130 = vand.u32 %v997, 2147483648
    %v1131 = vor.u32 1.1754944e-38, %v1130
    %v1132 = vsel %vm1129, %v1131, %v1127
    %v1133 = vmul.f32 %v752, %v1132
    %v1134 = vmul.f32 %v754, %v1132
    %v1135 = vrcp.pop %v998
    %v1136 = vmul.f32 %v998, %v1135
    %v1137 = vsub.f32 1.0, %v1136
    %v1138 = vmul.f32 %v1135, %v1137
    %v1139 = vadd.f32 %v1135, %v1138
    %vm1140 = vweird.f32 %v998
    %vm1141 = vweird.f32 %v1135
    %vm1142 = vmor %vm1140, %vm1141
    %v1143 = vsel %vm1142, %v1135, %v1139
    %v1144 = vand.u32 2147483647, %v998
    %vm1145 = vcmp.eq.f32.partialorder %v1144, 8.507059e+37
    %v1146 = vand.u32 %v998, 2147483648
    %v1147 = vor.u32 1.1754944e-38, %v1146
    %v1148 = vsel %vm1145, %v1147, %v1143
    %v1149 = vmul.f32 %v756, %v1148
    %v1150 = vmul.f32 %v758, %v1148
    %v1151 = vrcp.pop %v999
    %v1152 = vmul.f32 %v999, %v1151
    %v1153 = vsub.f32 1.0, %v1152
    %v1154 = vmul.f32 %v1151, %v1153
    %v1155 = vadd.f32 %v1151, %v1154
    %vm1156 = vweird.f32 %v999
    %vm1157 = vweird.f32 %v1151
    %vm1158 = vmor %vm1156, %vm1157
    %v1159 = vsel %vm1158, %v1151, %v1155
    %v1160 = vand.u32 2147483647, %v999
    %vm1161 = vcmp.eq.f32.partialorder %v1160, 8.507059e+37
    %v1162 = vand.u32 %v999, 2147483648
    %v1163 = vor.u32 1.1754944e-38, %v1162
    %v1164 = vsel %vm1161, %v1163, %v1159
    %v1165 = vmul.f32 %v760, %v1164
    %v1166 = vmul.f32 %v762, %v1164
    %v1167 = vrcp.pop %v1000
    %v1168 = vmul.f32 %v1000, %v1167
    %v1169 = vsub.f32 1.0, %v1168
    %v1170 = vmul.f32 %v1167, %v1169
    %v1171 = vadd.f32 %v1167, %v1170
    %vm1172 = vweird.f32 %v1000
    %vm1173 = vweird.f32 %v1167
    %vm1174 = vmor %vm1172, %vm1173
    %v1175 = vsel %vm1174, %v1167, %v1171
    %v1176 = vand.u32 2147483647, %v1000
    %vm1177 = vcmp.eq.f32.partialorder %v1176, 8.507059e+37
    %v1178 = vand.u32 %v1000, 2147483648
    %v1179 = vor.u32 1.1754944e-38, %v1178
    %v1180 = vsel %vm1177, %v1179, %v1175
    %v1181 = vmul.f32 %v764, %v1180
    %v1182 = vmul.f32 %v766, %v1180
    %v1183 = vrcp.pop %v1001
    %v1184 = vmul.f32 %v1001, %v1183
    %v1185 = vsub.f32 1.0, %v1184
    %v1186 = vmul.f32 %v1183, %v1185
    %v1187 = vadd.f32 %v1183, %v1186
    %vm1188 = vweird.f32 %v1001
    %vm1189 = vweird.f32 %v1183
    %vm1190 = vmor %vm1188, %vm1189
    %v1191 = vsel %vm1190, %v1183, %v1187
    %v1192 = vand.u32 2147483647, %v1001
    %vm1193 = vcmp.eq.f32.partialorder %v1192, 8.507059e+37
    %v1194 = vand.u32 %v1001, 2147483648
    %v1195 = vor.u32 1.1754944e-38, %v1194
    %v1196 = vsel %vm1193, %v1195, %v1191
    %v1197 = vmul.f32 %v768, %v1196
    %v1198 = vmul.f32 %v770, %v1196
    %v1199 = vrcp.pop %v1002
    %v1200 = vmul.f32 %v1002, %v1199
    %v1201 = vsub.f32 1.0, %v1200
    %v1202 = vmul.f32 %v1199, %v1201
    %v1203 = vadd.f32 %v1199, %v1202
    %vm1204 = vweird.f32 %v1002
    %vm1205 = vweird.f32 %v1199
    %vm1206 = vmor %vm1204, %vm1205
    %v1207 = vsel %vm1206, %v1199, %v1203
    %v1208 = vand.u32 2147483647, %v1002
    %vm1209 = vcmp.eq.f32.partialorder %v1208, 8.507059e+37
    %v1210 = vand.u32 %v1002, 2147483648
    %v1211 = vor.u32 1.1754944e-38, %v1210
    %v1212 = vsel %vm1209, %v1211, %v1207
    %v1213 = vmul.f32 %v772, %v1212
    %v1214 = vmul.f32 %v774, %v1212
    %v1215 = vrcp.pop %v1003
    %v1216 = vmul.f32 %v1003, %v1215
    %v1217 = vsub.f32 1.0, %v1216
    %v1218 = vmul.f32 %v1215, %v1217
    %v1219 = vadd.f32 %v1215, %v1218
    %vm1220 = vweird.f32 %v1003
    %vm1221 = vweird.f32 %v1215
    %vm1222 = vmor %vm1220, %vm1221
    %v1223 = vsel %vm1222, %v1215, %v1219
    %v1224 = vand.u32 2147483647, %v1003
    %vm1225 = vcmp.eq.f32.partialorder %v1224, 8.507059e+37
    %v1226 = vand.u32 %v1003, 2147483648
    %v1227 = vor.u32 1.1754944e-38, %v1226
    %v1228 = vsel %vm1225, %v1227, %v1223
    %v1229 = vmul.f32 %v776, %v1228
    %v1230 = vmul.f32 %v778, %v1228
    %v1231 = vrcp.pop %v1004
    %v1232 = vmul.f32 %v1004, %v1231
    %v1233 = vsub.f32 1.0, %v1232
    %v1234 = vmul.f32 %v1231, %v1233
    %v1235 = vadd.f32 %v1231, %v1234
    %vm1236 = vweird.f32 %v1004
    %vm1237 = vweird.f32 %v1231
    %vm1238 = vmor %vm1236, %vm1237
    %v1239 = vsel %vm1238, %v1231, %v1235
    %v1240 = vand.u32 2147483647, %v1004
    %vm1241 = vcmp.eq.f32.partialorder %v1240, 8.507059e+37
    %v1242 = vand.u32 %v1004, 2147483648
    %v1243 = vor.u32 1.1754944e-38, %v1242
    %v1244 = vsel %vm1241, %v1243, %v1239
    %v1245 = vmul.f32 %v780, %v1244
    %v1246 = vmul.f32 %v782, %v1244
    %v1247 = vrcp.pop %v1005
    %v1248 = vmul.f32 %v1005, %v1247
    %v1249 = vsub.f32 1.0, %v1248
    %v1250 = vmul.f32 %v1247, %v1249
    %v1251 = vadd.f32 %v1247, %v1250
    %vm1252 = vweird.f32 %v1005
    %vm1253 = vweird.f32 %v1247
    %vm1254 = vmor %vm1252, %vm1253
    %v1255 = vsel %vm1254, %v1247, %v1251
    %v1256 = vand.u32 2147483647, %v1005
    %vm1257 = vcmp.eq.f32.partialorder %v1256, 8.507059e+37
    %v1258 = vand.u32 %v1005, 2147483648
    %v1259 = vor.u32 1.1754944e-38, %v1258
    %v1260 = vsel %vm1257, %v1259, %v1255
    %v1261 = vmul.f32 %v784, %v1260
    %v1262 = vmul.f32 %v786, %v1260
    %v1263 = vrcp.pop %v1006
    %v1264 = vmul.f32 %v1006, %v1263
    %v1265 = vsub.f32 1.0, %v1264
    %v1266 = vmul.f32 %v1263, %v1265
    %v1267 = vadd.f32 %v1263, %v1266
    %vm1268 = vweird.f32 %v1006
    %vm1269 = vweird.f32 %v1263
    %vm1270 = vmor %vm1268, %vm1269
    %v1271 = vsel %vm1270, %v1263, %v1267
    %v1272 = vand.u32 2147483647, %v1006
    %vm1273 = vcmp.eq.f32.partialorder %v1272, 8.507059e+37
    %v1274 = vand.u32 %v1006, 2147483648
    %v1275 = vor.u32 1.1754944e-38, %v1274
    %v1276 = vsel %vm1273, %v1275, %v1271
    %v1277 = vmul.f32 %v788, %v1276
    %v1278 = vmul.f32 %v790, %v1276
    %1311 = vset.pattern.permute.xlu0 0
    %1312 = vperm.xlu0 %1311, %v1037
    %v1313 = vpop.permute.xlu0 %1312
    %1314 = vset.pattern.permute.xlu0 0
    %1315 = vperm.xlu0 %1314, %v1038
    %v1316 = vpop.permute.xlu0 %1315
    %1317 = vset.pattern.permute.xlu0 0
    %1318 = vperm.xlu0 %1317, %v1053
    %v1319 = vpop.permute.xlu0 %1318
    %1320 = vset.pattern.permute.xlu0 0
    %1321 = vperm.xlu0 %1320, %v1054
    %v1322 = vpop.permute.xlu0 %1321
    %1323 = vset.pattern.permute.xlu0 0
    %1324 = vperm.xlu0 %1323, %v1069
    %v1325 = vpop.permute.xlu0 %1324
    %1326 = vset.pattern.permute.xlu0 0
    %1327 = vperm.xlu0 %1326, %v1070
    %v1328 = vpop.permute.xlu0 %1327
    %1329 = vset.pattern.permute.xlu0 0
    %1330 = vperm.xlu0 %1329, %v1085
    %v1331 = vpop.permute.xlu0 %1330
    %1332 = vset.pattern.permute.xlu0 0
    %1333 = vperm.xlu0 %1332, %v1086
    %v1334 = vpop.permute.xlu0 %1333
    %1335 = vset.pattern.permute.xlu0 0
    %1336 = vperm.xlu0 %1335, %v1101
    %v1337 = vpop.permute.xlu0 %1336
    %1338 = vset.pattern.permute.xlu0 0
    %1339 = vperm.xlu0 %1338, %v1102
    %v1340 = vpop.permute.xlu0 %1339
    %1341 = vset.pattern.permute.xlu0 0
    %1342 = vperm.xlu0 %1341, %v1117
    %v1343 = vpop.permute.xlu0 %1342
    %1344 = vset.pattern.permute.xlu0 0
    %1345 = vperm.xlu0 %1344, %v1118
    %v1346 = vpop.permute.xlu0 %1345
    %1347 = vset.pattern.permute.xlu0 0
    %1348 = vperm.xlu0 %1347, %v1133
    %v1349 = vpop.permute.xlu0 %1348
    %1350 = vset.pattern.permute.xlu0 0
    %1351 = vperm.xlu0 %1350, %v1134
    %v1352 = vpop.permute.xlu0 %1351
    %1353 = vset.pattern.permute.xlu0 0
    %1354 = vperm.xlu0 %1353, %v1149
    %v1355 = vpop.permute.xlu0 %1354
    %1356 = vset.pattern.permute.xlu0 0
    %1357 = vperm.xlu0 %1356, %v1150
    %v1358 = vpop.permute.xlu0 %1357
    %1359 = vset.pattern.permute.xlu0 0
    %1360 = vperm.xlu0 %1359, %v1165
    %v1361 = vpop.permute.xlu0 %1360
    %1362 = vset.pattern.permute.xlu0 0
    %1363 = vperm.xlu0 %1362, %v1166
    %v1364 = vpop.permute.xlu0 %1363
    %1365 = vset.pattern.permute.xlu0 0
    %1366 = vperm.xlu0 %1365, %v1181
    %v1367 = vpop.permute.xlu0 %1366
    %1368 = vset.pattern.permute.xlu0 0
    %1369 = vperm.xlu0 %1368, %v1182
    %v1370 = vpop.permute.xlu0 %1369
    %1371 = vset.pattern.permute.xlu0 0
    %1372 = vperm.xlu0 %1371, %v1197
    %v1373 = vpop.permute.xlu0 %1372
    %1374 = vset.pattern.permute.xlu0 0
    %1375 = vperm.xlu0 %1374, %v1198
    %v1376 = vpop.permute.xlu0 %1375
    %1377 = vset.pattern.permute.xlu0 0
    %1378 = vperm.xlu0 %1377, %v1213
    %v1379 = vpop.permute.xlu0 %1378
    %1380 = vset.pattern.permute.xlu0 0
    %1381 = vperm.xlu0 %1380, %v1214
    %v1382 = vpop.permute.xlu0 %1381
    %1383 = vset.pattern.permute.xlu0 0
    %1384 = vperm.xlu0 %1383, %v1229
    %v1385 = vpop.permute.xlu0 %1384
    %1386 = vset.pattern.permute.xlu0 0
    %1387 = vperm.xlu0 %1386, %v1230
    %v1388 = vpop.permute.xlu0 %1387
    %1389 = vset.pattern.permute.xlu0 0
    %1390 = vperm.xlu0 %1389, %v1245
    %v1391 = vpop.permute.xlu0 %1390
    %1392 = vset.pattern.permute.xlu0 0
    %1393 = vperm.xlu0 %1392, %v1246
    %v1394 = vpop.permute.xlu0 %1393
    %1395 = vset.pattern.permute.xlu0 0
    %1396 = vperm.xlu0 %1395, %v1261
    %v1397 = vpop.permute.xlu0 %1396
    %1398 = vset.pattern.permute.xlu0 0
    %1399 = vperm.xlu0 %1398, %v1262
    %v1400 = vpop.permute.xlu0 %1399
    %1401 = vset.pattern.permute.xlu0 0
    %1402 = vperm.xlu0 %1401, %v1277
    %v1403 = vpop.permute.xlu0 %1402
    %1404 = vset.pattern.permute.xlu0 0
    %1405 = vperm.xlu0 %1404, %v1278
    %v1406 = vpop.permute.xlu0 %1405
    %v1407 = vperm.slane %v1313, %v580
    %v1408 = vperm.slane %v1316, %v582
    %v1409 = vsel %vm584, %v1408, %v1407
    %v1410 = vperm.slane %v1319, %v580
    %v1411 = vperm.slane %v1322, %v582
    %v1412 = vsel %vm584, %v1411, %v1410
    %v1413 = vperm.slane %v1325, %v580
    %v1414 = vperm.slane %v1328, %v582
    %v1415 = vsel %vm584, %v1414, %v1413
    %v1416 = vperm.slane %v1331, %v580
    %v1417 = vperm.slane %v1334, %v582
    %v1418 = vsel %vm584, %v1417, %v1416
    %v1419 = vperm.slane %v1337, %v580
    %v1420 = vperm.slane %v1340, %v582
    %v1421 = vsel %vm584, %v1420, %v1419
    %v1422 = vperm.slane %v1343, %v580
    %v1423 = vperm.slane %v1346, %v582
    %v1424 = vsel %vm584, %v1423, %v1422
    %v1425 = vperm.slane %v1349, %v580
    %v1426 = vperm.slane %v1352, %v582
    %v1427 = vsel %vm584, %v1426, %v1425
    %v1428 = vperm.slane %v1355, %v580
    %v1429 = vperm.slane %v1358, %v582
    %v1430 = vsel %vm584, %v1429, %v1428
    %v1431 = vperm.slane %v1361, %v580
    %v1432 = vperm.slane %v1364, %v582
    %v1433 = vsel %vm584, %v1432, %v1431
    %v1434 = vperm.slane %v1367, %v580
    %v1435 = vperm.slane %v1370, %v582
    %v1436 = vsel %vm584, %v1435, %v1434
    %v1437 = vperm.slane %v1373, %v580
    %v1438 = vperm.slane %v1376, %v582
    %v1439 = vsel %vm584, %v1438, %v1437
    %v1440 = vperm.slane %v1379, %v580
    %v1441 = vperm.slane %v1382, %v582
    %v1442 = vsel %vm584, %v1441, %v1440
    %v1443 = vperm.slane %v1385, %v580
    %v1444 = vperm.slane %v1388, %v582
    %v1445 = vsel %vm584, %v1444, %v1443
    %v1446 = vperm.slane %v1391, %v580
    %v1447 = vperm.slane %v1394, %v582
    %v1448 = vsel %vm584, %v1447, %v1446
    %v1449 = vperm.slane %v1397, %v580
    %v1450 = vperm.slane %v1400, %v582
    %v1451 = vsel %vm584, %v1450, %v1449
    %v1452 = vperm.slane %v1403, %v580
    %v1453 = vperm.slane %v1406, %v582
    %v1454 = vsel %vm584, %v1453, %v1452
    %v1455 = vsel %vm631, %v1412, %v1409
    %v1456 = vsel %vm633, %v1415, %v1455
    %v1457 = vsel %vm635, %v1418, %v1456
    %v1458 = vsel %vm637, %v1421, %v1457
    %v1459 = vsel %vm639, %v1424, %v1458
    %v1460 = vsel %vm641, %v1427, %v1459
    %v1461 = vsel %vm643, %v1430, %v1460
    %v1462 = vsel %vm631, %v1436, %v1433
    %v1463 = vsel %vm633, %v1439, %v1462
    %v1464 = vsel %vm635, %v1442, %v1463
    %v1465 = vsel %vm637, %v1445, %v1464
    %v1466 = vsel %vm639, %v1448, %v1465
    %v1467 = vsel %vm641, %v1451, %v1466
    %v1468 = vsel %vm643, %v1454, %v1467
    %1471 = vst.msk [vmem:[#allocation10] sm:$0xff] %vm654, %v1461
    %1472 = vst.msk [vmem:[#allocation10 + $0x8] sm:$0xff] %vm654, %v1468
    %v1505 = vmul.f32 %v339, %v1313
    %v1506 = vmul.f32 %v340, %v1316
    %v1507 = vmul.f32 %v341, %v1319
    %v1508 = vmul.f32 %v342, %v1322
    %v1509 = vmul.f32 %v343, %v1325
    %v1510 = vmul.f32 %v344, %v1328
    %v1511 = vmul.f32 %v345, %v1331
    %v1512 = vmul.f32 %v346, %v1334
    %v1513 = vmul.f32 %v347, %v1337
    %v1514 = vmul.f32 %v348, %v1340
    %v1515 = vmul.f32 %v349, %v1343
    %v1516 = vmul.f32 %v350, %v1346
    %v1517 = vmul.f32 %v351, %v1349
    %v1518 = vmul.f32 %v352, %v1352
    %v1519 = vmul.f32 %v353, %v1355
    %v1520 = vmul.f32 %v354, %v1358
    %v1521 = vmul.f32 %v355, %v1361
    %v1522 = vmul.f32 %v356, %v1364
    %v1523 = vmul.f32 %v357, %v1367
    %v1524 = vmul.f32 %v358, %v1370
    %v1525 = vmul.f32 %v359, %v1373
    %v1526 = vmul.f32 %v360, %v1376
    %v1527 = vmul.f32 %v361, %v1379
    %v1528 = vmul.f32 %v362, %v1382
    %v1529 = vmul.f32 %v363, %v1385
    %v1530 = vmul.f32 %v364, %v1388
    %v1531 = vmul.f32 %v365, %v1391
    %v1532 = vmul.f32 %v366, %v1394
    %v1533 = vmul.f32 %v367, %v1397
    %v1534 = vmul.f32 %v368, %v1400
    %v1535 = vmul.f32 %v369, %v1403
    %v1536 = vmul.f32 %v370, %v1406
    %v1537 = vsel %vm114, %v1505, 0.0
    %v1538 = vsel %vm114, %v1506, 0.0
    %v1539 = vadd.f32 %v1537, %v1538
    %v1540 = vrot.slane %v1539, 4
    %v1541 = vadd.f32 %v1539, %v1540
    %v1542 = vrot.slane %v1541, 2
    %v1543 = vadd.f32 %v1541, %v1542
    %v1544 = vrot.slane %v1543, 1
    %v1545 = vadd.f32 %v1543, %v1544
    %v1546 = vsel %vm114, %v1507, 0.0
    %v1547 = vsel %vm114, %v1508, 0.0
    %v1548 = vadd.f32 %v1546, %v1547
    %v1549 = vrot.slane %v1548, 4
    %v1550 = vadd.f32 %v1548, %v1549
    %v1551 = vrot.slane %v1550, 2
    %v1552 = vadd.f32 %v1550, %v1551
    %v1553 = vrot.slane %v1552, 1
    %v1554 = vadd.f32 %v1552, %v1553
    %v1555 = vsel %vm114, %v1509, 0.0
    %v1556 = vsel %vm114, %v1510, 0.0
    %v1557 = vadd.f32 %v1555, %v1556
    %v1558 = vrot.slane %v1557, 4
    %v1559 = vadd.f32 %v1557, %v1558
    %v1560 = vrot.slane %v1559, 2
    %v1561 = vadd.f32 %v1559, %v1560
    %v1562 = vrot.slane %v1561, 1
    %v1563 = vadd.f32 %v1561, %v1562
    %v1564 = vsel %vm114, %v1511, 0.0
    %v1565 = vsel %vm114, %v1512, 0.0
    %v1566 = vadd.f32 %v1564, %v1565
    %v1567 = vrot.slane %v1566, 4
    %v1568 = vadd.f32 %v1566, %v1567
    %v1569 = vrot.slane %v1568, 2
    %v1570 = vadd.f32 %v1568, %v1569
    %v1571 = vrot.slane %v1570, 1
    %v1572 = vadd.f32 %v1570, %v1571
    %v1573 = vsel %vm114, %v1513, 0.0
    %v1574 = vsel %vm114, %v1514, 0.0
    %v1575 = vadd.f32 %v1573, %v1574
    %v1576 = vrot.slane %v1575, 4
    %v1577 = vadd.f32 %v1575, %v1576
    %v1578 = vrot.slane %v1577, 2
    %v1579 = vadd.f32 %v1577, %v1578
    %v1580 = vrot.slane %v1579, 1
    %v1581 = vadd.f32 %v1579, %v1580
    %v1582 = vsel %vm114, %v1515, 0.0
    %v1583 = vsel %vm114, %v1516, 0.0
    %v1584 = vadd.f32 %v1582, %v1583
    %v1585 = vrot.slane %v1584, 4
    %v1586 = vadd.f32 %v1584, %v1585
    %v1587 = vrot.slane %v1586, 2
    %v1588 = vadd.f32 %v1586, %v1587
    %v1589 = vrot.slane %v1588, 1
    %v1590 = vadd.f32 %v1588, %v1589
    %v1591 = vsel %vm114, %v1517, 0.0
    %v1592 = vsel %vm114, %v1518, 0.0
    %v1593 = vadd.f32 %v1591, %v1592
    %v1594 = vrot.slane %v1593, 4
    %v1595 = vadd.f32 %v1593, %v1594
    %v1596 = vrot.slane %v1595, 2
    %v1597 = vadd.f32 %v1595, %v1596
    %v1598 = vrot.slane %v1597, 1
    %v1599 = vadd.f32 %v1597, %v1598
    %v1600 = vsel %vm114, %v1519, 0.0
    %v1601 = vsel %vm114, %v1520, 0.0
    %v1602 = vadd.f32 %v1600, %v1601
    %v1603 = vrot.slane %v1602, 4
    %v1604 = vadd.f32 %v1602, %v1603
    %v1605 = vrot.slane %v1604, 2
    %v1606 = vadd.f32 %v1604, %v1605
    %v1607 = vrot.slane %v1606, 1
    %v1608 = vadd.f32 %v1606, %v1607
    %v1609 = vsel %vm114, %v1521, 0.0
    %v1610 = vsel %vm114, %v1522, 0.0
    %v1611 = vadd.f32 %v1609, %v1610
    %v1612 = vrot.slane %v1611, 4
    %v1613 = vadd.f32 %v1611, %v1612
    %v1614 = vrot.slane %v1613, 2
    %v1615 = vadd.f32 %v1613, %v1614
    %v1616 = vrot.slane %v1615, 1
    %v1617 = vadd.f32 %v1615, %v1616
    %v1618 = vsel %vm114, %v1523, 0.0
    %v1619 = vsel %vm114, %v1524, 0.0
    %v1620 = vadd.f32 %v1618, %v1619
    %v1621 = vrot.slane %v1620, 4
    %v1622 = vadd.f32 %v1620, %v1621
    %v1623 = vrot.slane %v1622, 2
    %v1624 = vadd.f32 %v1622, %v1623
    %v1625 = vrot.slane %v1624, 1
    %v1626 = vadd.f32 %v1624, %v1625
    %v1627 = vsel %vm114, %v1525, 0.0
    %v1628 = vsel %vm114, %v1526, 0.0
    %v1629 = vadd.f32 %v1627, %v1628
    %v1630 = vrot.slane %v1629, 4
    %v1631 = vadd.f32 %v1629, %v1630
    %v1632 = vrot.slane %v1631, 2
    %v1633 = vadd.f32 %v1631, %v1632
    %v1634 = vrot.slane %v1633, 1
    %v1635 = vadd.f32 %v1633, %v1634
    %v1636 = vsel %vm114, %v1527, 0.0
    %v1637 = vsel %vm114, %v1528, 0.0
    %v1638 = vadd.f32 %v1636, %v1637
    %v1639 = vrot.slane %v1638, 4
    %v1640 = vadd.f32 %v1638, %v1639
    %v1641 = vrot.slane %v1640, 2
    %v1642 = vadd.f32 %v1640, %v1641
    %v1643 = vrot.slane %v1642, 1
    %v1644 = vadd.f32 %v1642, %v1643
    %v1645 = vsel %vm114, %v1529, 0.0
    %v1646 = vsel %vm114, %v1530, 0.0
    %v1647 = vadd.f32 %v1645, %v1646
    %v1648 = vrot.slane %v1647, 4
    %v1649 = vadd.f32 %v1647, %v1648
    %v1650 = vrot.slane %v1649, 2
    %v1651 = vadd.f32 %v1649, %v1650
    %v1652 = vrot.slane %v1651, 1
    %v1653 = vadd.f32 %v1651, %v1652
    %v1654 = vsel %vm114, %v1531, 0.0
    %v1655 = vsel %vm114, %v1532, 0.0
    %v1656 = vadd.f32 %v1654, %v1655
    %v1657 = vrot.slane %v1656, 4
    %v1658 = vadd.f32 %v1656, %v1657
    %v1659 = vrot.slane %v1658, 2
    %v1660 = vadd.f32 %v1658, %v1659
    %v1661 = vrot.slane %v1660, 1
    %v1662 = vadd.f32 %v1660, %v1661
    %v1663 = vsel %vm114, %v1533, 0.0
    %v1664 = vsel %vm114, %v1534, 0.0
    %v1665 = vadd.f32 %v1663, %v1664
    %v1666 = vrot.slane %v1665, 4
    %v1667 = vadd.f32 %v1665, %v1666
    %v1668 = vrot.slane %v1667, 2
    %v1669 = vadd.f32 %v1667, %v1668
    %v1670 = vrot.slane %v1669, 1
    %v1671 = vadd.f32 %v1669, %v1670
    %v1672 = vsel %vm114, %v1535, 0.0
    %v1673 = vsel %vm114, %v1536, 0.0
    %v1674 = vadd.f32 %v1672, %v1673
    %v1675 = vrot.slane %v1674, 4
    %v1676 = vadd.f32 %v1674, %v1675
    %v1677 = vrot.slane %v1676, 2
    %v1678 = vadd.f32 %v1676, %v1677
    %v1679 = vrot.slane %v1678, 1
    %v1680 = vadd.f32 %v1678, %v1679
    %v1681 = vadd.f32 %v1545, 0.0
    %v1682 = vadd.f32 %v1554, 0.0
    %v1683 = vadd.f32 %v1563, 0.0
    %v1684 = vadd.f32 %v1572, 0.0
    %v1685 = vadd.f32 %v1581, 0.0
    %v1686 = vadd.f32 %v1590, 0.0
    %v1687 = vadd.f32 %v1599, 0.0
    %v1688 = vadd.f32 %v1608, 0.0
    %v1689 = vadd.f32 %v1617, 0.0
    %v1690 = vadd.f32 %v1626, 0.0
    %v1691 = vadd.f32 %v1635, 0.0
    %v1692 = vadd.f32 %v1644, 0.0
    %v1693 = vadd.f32 %v1653, 0.0
    %v1694 = vadd.f32 %v1662, 0.0
    %v1695 = vadd.f32 %v1671, 0.0
    %v1696 = vadd.f32 %v1680, 0.0
    %v1713 = vsel %vm631, %v1682, %v1681
    %v1714 = vsel %vm633, %v1683, %v1713
    %v1715 = vsel %vm635, %v1684, %v1714
    %v1716 = vsel %vm637, %v1685, %v1715
    %v1717 = vsel %vm639, %v1686, %v1716
    %v1718 = vsel %vm641, %v1687, %v1717
    %v1719 = vsel %vm643, %v1688, %v1718
    %v1720 = vsel %vm631, %v1690, %v1689
    %v1721 = vsel %vm633, %v1691, %v1720
    %v1722 = vsel %vm635, %v1692, %v1721
    %v1723 = vsel %vm637, %v1693, %v1722
    %v1724 = vsel %vm639, %v1694, %v1723
    %v1725 = vsel %vm641, %v1695, %v1724
    %v1726 = vsel %vm643, %v1696, %v1725
    %1729 = vst.msk [vmem:[#allocation11] sm:$0xff] %vm114, %v1719
    %1730 = vst.msk [vmem:[#allocation11 + $0x8] sm:$0xff] %vm114, %v1726
    // Predicated region
    $region42: #{tpu_custom_call.1} parent=1 // pred_check
      _
    $region43: #{tpu_custom_call.1} parent=1 // pred_check_branch
      %1732 = sbr.rel (0) target = $region45
    $region44: #{tpu_custom_call.1} parent=1 // pred_region
      %1734 = vsyncadd [#allocation4], 0
      %s1735 = sshll.u32 [#allocation10], 4
      %s1736 = int_to_ptr.vmem [resolvable:$true] %s1735
      %s1737 = sshll.u32 %s6, 4
      %s1738 = int_to_ptr.hbm [resolvable:$true] %s1737
      %1743 = dma.vmem_to_hbm [thread:$0]  %s1736, 256, %s1738, [#allocation4], 128, 128, 8
    $region45: #{tpu_custom_call.1} parent=1 // pred_fallthru
      _
    // Predicated region
    $region46: #{tpu_custom_call.1} parent=1 // pred_check
      _
    $region47: #{tpu_custom_call.1} parent=1 // pred_check_branch
      %1745 = sbr.rel (0) target = $region49
    $region48: #{tpu_custom_call.1} parent=1 // pred_region
      %1747 = vsyncadd [#allocation12], 0
      %s1748 = sshll.u32 [#allocation11], 4
      %s1749 = int_to_ptr.vmem [resolvable:$true] %s1748
      %s1750 = sshll.u32 %s7, 4
      %s1751 = int_to_ptr.hbm [resolvable:$true] %s1750
      %1756 = dma.vmem_to_hbm [thread:$0]  %s1749, 256, %s1751, [#allocation12], 128, 128, 8
    $region49: #{tpu_custom_call.1} parent=1 // pred_fallthru
      _
    // Predicated region
    $region50: #{tpu_custom_call.1} parent=1 // pred_check
      _
    $region51: #{tpu_custom_call.1} parent=1 // pred_check_branch
      %1758 = sbr.rel (0) target = $region53
    $region52: #{tpu_custom_call.1} parent=1 // pred_region
      %1760 = dma.done [#allocation4], 256
    $region53: #{tpu_custom_call.1} parent=1 // pred_fallthru
      _
    // Predicated region
    $region54: #{tpu_custom_call.1} parent=1 // pred_check
      _
    $region55: #{tpu_custom_call.1} parent=1 // pred_check_branch
      %1762 = sbr.rel (0) target = $region57
    $region56: #{tpu_custom_call.1} parent=1 // pred_region
      %1764 = dma.done [#allocation12], 256
    $region57: #{tpu_custom_call.1} parent=1 // pred_fallthru
      _
    %1765 = vsyncpa [#allocation3], 1
    %1766 = vsyncpa [#allocation6], 1
    %1767 = vsyncpa [#allocation9], 1
    %1768 = vsyncpa [#allocation4], 1
    %1769 = vsyncpa [#allocation12], 1

</llo_original>
